<compile_context>
chip_gen: v7x
topology: tpu7x:2x2x1
jax: 0.10.0
libtpu: 0.0.40
codegen_flags: <defaults>
</compile_context>

<pallas_src>
import math
import functools

import jax
import jax.numpy as jnp
from jax.experimental import pallas as pl
from jax.experimental.pallas import tpu as pltpu


# ---------------- config (small, consistent with the module) ----------------
class Cfg:
    vocab_size = 64
    block_size = 16
    n_layer = 2
    n_head = 4
    n_embd = 32


LANE = 128  # pad vocab so the logits store is lane-dense


# ---------------- in-kernel helpers ----------------
def _layernorm(h, w, b, eps=1e-5):
    mu = jnp.mean(h, axis=-1, keepdims=True)
    var = jnp.mean(jnp.square(h - mu), axis=-1, keepdims=True)
    return (h - mu) * jax.lax.rsqrt(var + eps) * w + b


def _gelu_tanh(x):
    c = math.sqrt(2.0 / math.pi)
    return 0.5 * x * (1.0 + jnp.tanh(c * (x + 0.044715 * x * x * x)))


# ---------------- fused forward kernel (grid over layers) ----------------
def gpt_fused_kernel(n_head, n_layer,
                     x0_ref, bias_ref,
                     ln1w_ref, ln1b_ref, wqkv_ref, bqkv_ref,
                     wap_ref, bap_ref, ln2w_ref, ln2b_ref,
                     wfc_ref, bfc_ref, wmp_ref, bmp_ref,
                     lnfw_ref, lnfb_ref, wteT_ref,
                     logits_ref, x_scr):
    l = pl.program_id(0)

    # Load the token+position embeddings into the resident residual stream once.
    @pl.when(l == 0)
    def _():
        x_scr[...] = x0_ref[...]

    x = x_scr[...]                       # (BT, C) residual stream, f32
    BT, C = x.shape
    H = n_head
    hd = C // H
    scale = 1.0 / math.sqrt(hd)
    attn_bias = bias_ref[...]            # (BT, BT): 0 where allowed, -1e30 masked

    # ---- causal self-attention: x + proj(softmax(qk^T/sqrt(d) + bias) v) ----
    h = _layernorm(x, ln1w_ref[0], ln1b_ref[0])
    qkv = jnp.dot(h, wqkv_ref[0], preferred_element_type=jnp.float32) + bqkv_ref[0]
    wap = wap_ref[0]                     # (C, C), pre-transposed (in, out)

    y_proj = jnp.zeros((BT, C), jnp.float32)
    for hh in range(H):                  # static head loop; all matmuls are 2D
        q = qkv[:, hh * hd:(hh + 1) * hd]                  # (BT, hd)
        k = qkv[:, C + hh * hd:C + (hh + 1) * hd]          # (BT, hd)
        v = qkv[:, 2 * C + hh * hd:2 * C + (hh + 1) * hd]  # (BT, hd)
        s = jax.lax.dot_general(q, k, (((1,), (1,)), ((), ())),
                                preferred_element_type=jnp.float32)
        s = s * scale + attn_bias                          # (BT, BT)
        m = jnp.max(s, axis=-1, keepdims=True)
        e = jnp.exp(s - m)
        inv = pl.reciprocal(jnp.sum(e, axis=-1, keepdims=True), approx=True)
        p = e * inv
        y_h = jnp.dot(p, v, preferred_element_type=jnp.float32)   # (BT, hd)
        # fold this head's slice of the output projection in directly (no concat)
        y_proj = y_proj + jnp.dot(y_h, wap[hh * hd:(hh + 1) * hd, :],
                                  preferred_element_type=jnp.float32)
    x = x + y_proj + bap_ref[0]

    # ---- MLP: x + c_proj(gelu_tanh(c_fc(ln2(x)))) ----
    h2 = _layernorm(x, ln2w_ref[0], ln2b_ref[0])
    f = jnp.dot(h2, wfc_ref[0], preferred_element_type=jnp.float32) + bfc_ref[0]
    g = _gelu_tanh(f)
    x = x + jnp.dot(g, wmp_ref[0], preferred_element_type=jnp.float32) + bmp_ref[0]
    x_scr[...] = x

    # ---- final LayerNorm + tied lm_head, on the last layer step only ----
    @pl.when(l == n_layer - 1)
    def _():
        hf = _layernorm(x, lnfw_ref[...], lnfb_ref[...])
        logits_ref[...] = jnp.dot(hf, wteT_ref[...],
                                  preferred_element_type=jnp.float32)


# ---------------- pallas_call wrapper ----------------
def _full_spec(a):
    n = a.ndim
    return pl.BlockSpec(a.shape, lambda l, n=n: (0,) * n)


def _layer_spec(a):
    n = a.ndim
    return pl.BlockSpec((1,) + a.shape[1:], lambda l, n=n: (l,) + (0,) * (n - 1))


def gpt_forward(idx, params, cfg):
    B, T = idx.shape
    assert T <= cfg.block_size
    C, L, V = cfg.n_embd, cfg.n_layer, cfg.vocab_size
    BT = B * T
    Vp = ((V + LANE - 1) // LANE) * LANE

    # Embedding gathers stay in plain JAX (no clean single-kernel gather win here).
    wte = params['wte']                                       # (V, C)
    tok_emb = jnp.take(wte, idx, axis=0)                      # (B, T, C)
    pos_emb = params['wpe'][:T][None, :, :]                   # (1, T, C)
    x0 = (tok_emb + pos_emb).reshape(BT, C).astype(jnp.float32)

    # Block-diagonal causal additive bias over the flattened (B*T) token axis.
    r = jnp.arange(BT)
    same_batch = (r[:, None] // T) == (r[None, :] // T)
    causal = (r[:, None] % T) >= (r[None, :] % T)
    attn_bias = jnp.where(same_batch & causal, 0.0, -1e30).astype(jnp.float32)

    st = params['stacked']
    lnf_w = params['lnf_w'].reshape(1, C)
    lnf_b = params['lnf_b'].reshape(1, C)
    # Tied lm_head weight: pre-transposed and lane-padded to 128 (zero columns).
    wte_t = jnp.zeros((C, Vp), jnp.float32).at[:, :V].set(wte.T)

    layer_keys = ('ln1_w', 'ln1_b', 'attn_w', 'attn_b',
                  'attnproj_w', 'attnproj_b', 'ln2_w', 'ln2_b',
                  'fc_w', 'fc_b', 'mlpproj_w', 'mlpproj_b')
    layer_args = tuple(st[k] for k in layer_keys)

    inputs = (x0, attn_bias) + layer_args + (lnf_w, lnf_b, wte_t)
    in_specs = ([_full_spec(x0), _full_spec(attn_bias)]
                + [_layer_spec(a) for a in layer_args]
                + [_full_spec(lnf_w), _full_spec(lnf_b), _full_spec(wte_t)])

    logits_pad = pl.pallas_call(
        functools.partial(gpt_fused_kernel, cfg.n_head, L),
        out_shape=jax.ShapeDtypeStruct((BT, Vp), jnp.float32),
        grid_spec=pltpu.PrefetchScalarGridSpec(
            num_scalar_prefetch=0,
            grid=(L,),
            in_specs=in_specs,
            out_specs=pl.BlockSpec((BT, Vp), lambda l: (0, 0)),
            scratch_shapes=[pltpu.VMEM((BT, C), jnp.float32)]),
        compiler_params=pltpu.CompilerParams(
            dimension_semantics=("arbitrary",)),
    )(*inputs)

    # TODO(synk): cross-entropy loss path (targets is not None) not implemented;
    # forward returns logits only.
    return logits_pad[:, :V].reshape(B, T, V)


# ---------------- parameters (deterministic, matches _init_weights semantics) ----
def init_params(cfg, key):
    V, C, L, S = cfg.vocab_size, cfg.n_embd, cfg.n_layer, cfg.block_size
    std = 0.02
    std_proj = 0.02 * (2 * L) ** -0.5
    k = jax.random.split(key, 6)

    def nrm(kk, shape, s):
        return jax.random.normal(kk, shape, dtype=jnp.float32) * s

    # Per-layer params stacked along a leading layer dim, linears pre-transposed
    # to (in_features, out_features) so the kernel computes x @ W.
    stacked = dict(
        ln1_w=jnp.ones((L, 1, C), jnp.float32),
        ln1_b=jnp.zeros((L, 1, C), jnp.float32),
        attn_w=nrm(k[2], (L, C, 3 * C), std),
        attn_b=jnp.zeros((L, 1, 3 * C), jnp.float32),
        attnproj_w=nrm(k[3], (L, C, C), std_proj),
        attnproj_b=jnp.zeros((L, 1, C), jnp.float32),
        ln2_w=jnp.ones((L, 1, C), jnp.float32),
        ln2_b=jnp.zeros((L, 1, C), jnp.float32),
        fc_w=nrm(k[4], (L, C, 4 * C), std),
        fc_b=jnp.zeros((L, 1, 4 * C), jnp.float32),
        mlpproj_w=nrm(k[5], (L, 4 * C, C), std_proj),
        mlpproj_b=jnp.zeros((L, 1, C), jnp.float32),
    )
    return {
        'wte': nrm(k[0], (V, C), std),            # tied with lm_head
        'wpe': nrm(k[1], (S, C), std),
        'lnf_w': jnp.ones((C,), jnp.float32),
        'lnf_b': jnp.zeros((C,), jnp.float32),
        'stacked': stacked,
    }


if __name__ == "__main__":
    cfg = Cfg()
    key = jax.random.PRNGKey(0)
    pkey, dkey = jax.random.split(key)
    params = init_params(cfg, pkey)

    B, T = 2, 8
    idx = jax.random.randint(dkey, (B, T), 0, cfg.vocab_size, dtype=jnp.int32)

    fwd = jax.jit(lambda i, p: gpt_forward(i, p, cfg))
    logits = fwd(idx, params)
    logits = jax.block_until_ready(logits)
    assert logits.shape == (B, T, cfg.vocab_size)
    assert bool(jnp.all(jnp.isfinite(logits)))
    print("KERNEL_OK")
</pallas_src>

<mosaic_0001>
module attributes {stable_mosaic.version = 11 : i64} {
  func.func @gpt_fused_kernel(%arg0: i32, %arg1: memref<16x32xf32, #tpu.memory_space<vmem>>, %arg2: memref<16x16xf32, #tpu.memory_space<vmem>>, %arg3: memref<1x1x32xf32, #tpu.memory_space<vmem>>, %arg4: memref<1x1x32xf32, #tpu.memory_space<vmem>>, %arg5: memref<1x32x96xf32, #tpu.memory_space<vmem>>, %arg6: memref<1x1x96xf32, #tpu.memory_space<vmem>>, %arg7: memref<1x32x32xf32, #tpu.memory_space<vmem>>, %arg8: memref<1x1x32xf32, #tpu.memory_space<vmem>>, %arg9: memref<1x1x32xf32, #tpu.memory_space<vmem>>, %arg10: memref<1x1x32xf32, #tpu.memory_space<vmem>>, %arg11: memref<1x32x128xf32, #tpu.memory_space<vmem>>, %arg12: memref<1x1x128xf32, #tpu.memory_space<vmem>>, %arg13: memref<1x128x32xf32, #tpu.memory_space<vmem>>, %arg14: memref<1x1x32xf32, #tpu.memory_space<vmem>>, %arg15: memref<1x32xf32, #tpu.memory_space<vmem>>, %arg16: memref<1x32xf32, #tpu.memory_space<vmem>>, %arg17: memref<32x128xf32, #tpu.memory_space<vmem>>, %arg18: memref<16x128xf32, #tpu.memory_space<vmem>>, %arg19: memref<16x32xf32, #tpu.memory_space<vmem>>) attributes {dimension_semantics = [#tpu.dimension_semantics<arbitrary>], iteration_bounds = array<i64: 2>, scalar_prefetch = 0 : i64, scratch_operands = 1 : i64, tpu.core_type = #tpu.core_type<tc>, window_params = [{pipeline_mode = #tpu.pipeline_mode<synchronous>, transform_indices = @transform_0, window_bounds = array<i64: 16, 32>}, {pipeline_mode = #tpu.pipeline_mode<synchronous>, transform_indices = @transform_1, window_bounds = array<i64: 16, 16>}, {transform_indices = @transform_2, window_bounds = array<i64: 1, 1, 32>}, {transform_indices = @transform_3, window_bounds = array<i64: 1, 1, 32>}, {transform_indices = @transform_4, window_bounds = array<i64: 1, 32, 96>}, {transform_indices = @transform_5, window_bounds = array<i64: 1, 1, 96>}, {transform_indices = @transform_6, window_bounds = array<i64: 1, 32, 32>}, {transform_indices = @transform_7, window_bounds = array<i64: 1, 1, 32>}, {transform_indices = @transform_8, window_bounds = array<i64: 1, 1, 32>}, {transform_indices = @transform_9, window_bounds = array<i64: 1, 1, 32>}, {transform_indices = @transform_10, window_bounds = array<i64: 1, 32, 128>}, {transform_indices = @transform_11, window_bounds = array<i64: 1, 1, 128>}, {transform_indices = @transform_12, window_bounds = array<i64: 1, 128, 32>}, {transform_indices = @transform_13, window_bounds = array<i64: 1, 1, 32>}, {pipeline_mode = #tpu.pipeline_mode<synchronous>, transform_indices = @transform_14, window_bounds = array<i64: 1, 32>}, {pipeline_mode = #tpu.pipeline_mode<synchronous>, transform_indices = @transform_15, window_bounds = array<i64: 1, 32>}, {pipeline_mode = #tpu.pipeline_mode<synchronous>, transform_indices = @transform_16, window_bounds = array<i64: 32, 128>}, {pipeline_mode = #tpu.pipeline_mode<synchronous>, transform_indices = @transform_17, window_bounds = array<i64: 16, 128>}]} {
    %c0_i32 = arith.constant 0 : i32
    %0 = arith.cmpi eq, %arg0, %c0_i32 : i32
    %1 = arith.extui %0 : i1 to i32
    %c0_i32_0 = arith.constant 0 : i32
    %2 = arith.cmpi ne, %1, %c0_i32_0 : i32
    scf.if %2 {
      %c0_84 = arith.constant 0 : index
      %c0_85 = arith.constant 0 : index
      %188 = vector.load %arg1[%c0_84, %c0_85] : memref<16x32xf32, #tpu.memory_space<vmem>>, vector<16x32xf32>
      %c0_86 = arith.constant 0 : index
      %c0_87 = arith.constant 0 : index
      %189 = vector.load %arg19[%c0_86, %c0_87] : memref<16x32xf32, #tpu.memory_space<vmem>>, vector<16x32xf32>
      tpu.vector_store %arg19[%c0_86, %c0_87], %188 {strides = array<i32>} : memref<16x32xf32, #tpu.memory_space<vmem>>, vector<16x32xf32>,
    } else {
    }
    %c0 = arith.constant 0 : index
    %c0_1 = arith.constant 0 : index
    %3 = vector.load %arg19[%c0, %c0_1] : memref<16x32xf32, #tpu.memory_space<vmem>>, vector<16x32xf32>
    %c0_2 = arith.constant 0 : index
    %c0_3 = arith.constant 0 : index
    %4 = vector.load %arg2[%c0_2, %c0_3] : memref<16x16xf32, #tpu.memory_space<vmem>>, vector<16x16xf32>
    %c0_4 = arith.constant 0 : index
    %c0_5 = arith.constant 0 : index
    %c0_6 = arith.constant 0 : index
    %5 = vector.load %arg3[%c0_4, %c0_5, %c0_6] : memref<1x1x32xf32, #tpu.memory_space<vmem>>, vector<1x1x32xf32>
    %6 = vector.shape_cast %5 : vector<1x1x32xf32> to vector<1x32xf32>
    %c0_7 = arith.constant 0 : index
    %c0_8 = arith.constant 0 : index
    %c0_9 = arith.constant 0 : index
    %7 = vector.load %arg4[%c0_7, %c0_8, %c0_9] : memref<1x1x32xf32, #tpu.memory_space<vmem>>, vector<1x1x32xf32>
    %8 = vector.shape_cast %7 : vector<1x1x32xf32> to vector<1x32xf32>
    %cst = arith.constant dense<0.000000e+00> : vector<16xf32>
    %9 = vector.multi_reduction <add>, %3, %cst [1] : vector<16x32xf32> to vector<16xf32>
    %10 = vector.shape_cast %9 : vector<16xf32> to vector<16x1xf32>
    %cst_10 = arith.constant 3.200000e+01 : f32
    %11 = vector.broadcast %cst_10 : f32 to vector<16x1xf32>
    %12 = arith.divf %10, %11 : vector<16x1xf32>
    %13 = vector.broadcast %12 : vector<16x1xf32> to vector<16x32xf32>
    %14 = arith.subf %3, %13 : vector<16x32xf32>
    %15 = arith.mulf %14, %14 : vector<16x32xf32>
    %cst_11 = arith.constant dense<0.000000e+00> : vector<16xf32>
    %16 = vector.multi_reduction <add>, %15, %cst_11 [1] : vector<16x32xf32> to vector<16xf32>
    %17 = vector.shape_cast %16 : vector<16xf32> to vector<16x1xf32>
    %cst_12 = arith.constant 3.200000e+01 : f32
    %18 = vector.broadcast %cst_12 : f32 to vector<16x1xf32>
    %19 = arith.divf %17, %18 : vector<16x1xf32>
    %20 = vector.broadcast %12 : vector<16x1xf32> to vector<16x32xf32>
    %21 = arith.subf %3, %20 : vector<16x32xf32>
    %cst_13 = arith.constant 9.99999974E-6 : f32
    %22 = vector.broadcast %cst_13 : f32 to vector<16x1xf32>
    %23 = arith.addf %19, %22 : vector<16x1xf32>
    %24 = math.rsqrt %23 : vector<16x1xf32>
    %25 = vector.broadcast %24 : vector<16x1xf32> to vector<16x32xf32>
    %26 = arith.mulf %21, %25 : vector<16x32xf32>
    %27 = vector.broadcast %6 : vector<1x32xf32> to vector<16x32xf32>
    %28 = arith.mulf %26, %27 : vector<16x32xf32>
    %29 = vector.broadcast %8 : vector<1x32xf32> to vector<16x32xf32>
    %30 = arith.addf %28, %29 : vector<16x32xf32>
    %c0_14 = arith.constant 0 : index
    %c0_15 = arith.constant 0 : index
    %c0_16 = arith.constant 0 : index
    %31 = vector.load %arg5[%c0_14, %c0_15, %c0_16] : memref<1x32x96xf32, #tpu.memory_space<vmem>>, vector<1x32x96xf32>
    %32 = vector.shape_cast %31 : vector<1x32x96xf32> to vector<32x96xf32>
    %cst_17 = arith.constant dense<0.000000e+00> : vector<16x96xf32>
    %33 = tpu.matmul %30, %32, %cst_17 {dimension_numbers = #tpu.dot_dimension_numbers<[1], [0], [0], [1], [0, 0, 1, 1], [], []>} : vector<16x32xf32>, vector<32x96xf32>, vector<16x96xf32> -> vector<16x96xf32>
    %c0_18 = arith.constant 0 : index
    %c0_19 = arith.constant 0 : index
    %c0_20 = arith.constant 0 : index
    %34 = vector.load %arg6[%c0_18, %c0_19, %c0_20] : memref<1x1x96xf32, #tpu.memory_space<vmem>>, vector<1x1x96xf32>
    %35 = vector.shape_cast %34 : vector<1x1x96xf32> to vector<1x96xf32>
    %36 = vector.broadcast %35 : vector<1x96xf32> to vector<16x96xf32>
    %37 = arith.addf %33, %36 : vector<16x96xf32>
    %c0_21 = arith.constant 0 : index
    %c0_22 = arith.constant 0 : index
    %c0_23 = arith.constant 0 : index
    %38 = vector.load %arg7[%c0_21, %c0_22, %c0_23] : memref<1x32x32xf32, #tpu.memory_space<vmem>>, vector<1x32x32xf32>
    %39 = vector.shape_cast %38 : vector<1x32x32xf32> to vector<32x32xf32>
    %cst_24 = arith.constant 0.000000e+00 : f32
    %40 = vector.broadcast %cst_24 : f32 to vector<16x32xf32>
    %41 = vector.extract_strided_slice %37 {offsets = [0, 0], sizes = [16, 8], strides = [1, 1]} : vector<16x96xf32> to vector<16x8xf32>
    %42 = vector.extract_strided_slice %37 {offsets = [0, 32], sizes = [16, 8], strides = [1, 1]} : vector<16x96xf32> to vector<16x8xf32>
    %43 = vector.extract_strided_slice %37 {offsets = [0, 64], sizes = [16, 8], strides = [1, 1]} : vector<16x96xf32> to vector<16x8xf32>
    %cst_25 = arith.constant dense<0.000000e+00> : vector<16x16xf32>
    %44 = tpu.matmul %41, %42, %cst_25 {dimension_numbers = #tpu.dot_dimension_numbers<[1], [1], [0], [0], [0, 0, 1, 0], [], []>} : vector<16x8xf32>, vector<16x8xf32>, vector<16x16xf32> -> vector<16x16xf32>
    %cst_26 = arith.constant 0.353553385 : f32
    %45 = vector.broadcast %cst_26 : f32 to vector<16x16xf32>
    %46 = arith.mulf %44, %45 : vector<16x16xf32>
    %47 = arith.addf %46, %4 : vector<16x16xf32>
    %cst_27 = arith.constant dense<0xFF800000> : vector<16xf32>
    %48 = vector.multi_reduction <maximumf>, %47, %cst_27 [1] : vector<16x16xf32> to vector<16xf32>
    %49 = vector.shape_cast %48 : vector<16xf32> to vector<16x1xf32>
    %50 = vector.broadcast %49 : vector<16x1xf32> to vector<16x16xf32>
    %51 = arith.subf %47, %50 : vector<16x16xf32>
    %52 = math.exp %51 : vector<16x16xf32>
    %cst_28 = arith.constant dense<0.000000e+00> : vector<16xf32>
    %53 = vector.multi_reduction <add>, %52, %cst_28 [1] : vector<16x16xf32> to vector<16xf32>
    %54 = vector.shape_cast %53 : vector<16xf32> to vector<16x1xf32>
    %55 = tpu.reciprocal %54 {approx = true} : vector<16x1xf32> -> vector<16x1xf32>
    %56 = vector.broadcast %55 : vector<16x1xf32> to vector<16x16xf32>
    %57 = arith.mulf %52, %56 : vector<16x16xf32>
    %cst_29 = arith.constant dense<0.000000e+00> : vector<16x8xf32>
    %58 = tpu.matmul %57, %43, %cst_29 {dimension_numbers = #tpu.dot_dimension_numbers<[1], [0], [0], [1], [0, 0, 1, 1], [], []>} : vector<16x16xf32>, vector<16x8xf32>, vector<16x8xf32> -> vector<16x8xf32>
    %59 = vector.extract_strided_slice %39 {offsets = [0, 0], sizes = [8, 32], strides = [1, 1]} : vector<32x32xf32> to vector<8x32xf32>
    %cst_30 = arith.constant dense<0.000000e+00> : vector<16x32xf32>
    %60 = tpu.matmul %58, %59, %cst_30 {dimension_numbers = #tpu.dot_dimension_numbers<[1], [0], [0], [1], [0, 0, 1, 1], [], []>} : vector<16x8xf32>, vector<8x32xf32>, vector<16x32xf32> -> vector<16x32xf32>
    %61 = arith.addf %40, %60 : vector<16x32xf32>
    %62 = vector.extract_strided_slice %37 {offsets = [0, 8], sizes = [16, 8], strides = [1, 1]} : vector<16x96xf32> to vector<16x8xf32>
    %63 = vector.extract_strided_slice %37 {offsets = [0, 40], sizes = [16, 8], strides = [1, 1]} : vector<16x96xf32> to vector<16x8xf32>
    %64 = vector.extract_strided_slice %37 {offsets = [0, 72], sizes = [16, 8], strides = [1, 1]} : vector<16x96xf32> to vector<16x8xf32>
    %cst_31 = arith.constant dense<0.000000e+00> : vector<16x16xf32>
    %65 = tpu.matmul %62, %63, %cst_31 {dimension_numbers = #tpu.dot_dimension_numbers<[1], [1], [0], [0], [0, 0, 1, 0], [], []>} : vector<16x8xf32>, vector<16x8xf32>, vector<16x16xf32> -> vector<16x16xf32>
    %cst_32 = arith.constant 0.353553385 : f32
    %66 = vector.broadcast %cst_32 : f32 to vector<16x16xf32>
    %67 = arith.mulf %65, %66 : vector<16x16xf32>
    %68 = arith.addf %67, %4 : vector<16x16xf32>
    %cst_33 = arith.constant dense<0xFF800000> : vector<16xf32>
    %69 = vector.multi_reduction <maximumf>, %68, %cst_33 [1] : vector<16x16xf32> to vector<16xf32>
    %70 = vector.shape_cast %69 : vector<16xf32> to vector<16x1xf32>
    %71 = vector.broadcast %70 : vector<16x1xf32> to vector<16x16xf32>
    %72 = arith.subf %68, %71 : vector<16x16xf32>
    %73 = math.exp %72 : vector<16x16xf32>
    %cst_34 = arith.constant dense<0.000000e+00> : vector<16xf32>
    %74 = vector.multi_reduction <add>, %73, %cst_34 [1] : vector<16x16xf32> to vector<16xf32>
    %75 = vector.shape_cast %74 : vector<16xf32> to vector<16x1xf32>
    %76 = tpu.reciprocal %75 {approx = true} : vector<16x1xf32> -> vector<16x1xf32>
    %77 = vector.broadcast %76 : vector<16x1xf32> to vector<16x16xf32>
    %78 = arith.mulf %73, %77 : vector<16x16xf32>
    %cst_35 = arith.constant dense<0.000000e+00> : vector<16x8xf32>
    %79 = tpu.matmul %78, %64, %cst_35 {dimension_numbers = #tpu.dot_dimension_numbers<[1], [0], [0], [1], [0, 0, 1, 1], [], []>} : vector<16x16xf32>, vector<16x8xf32>, vector<16x8xf32> -> vector<16x8xf32>
    %80 = vector.extract_strided_slice %39 {offsets = [8, 0], sizes = [8, 32], strides = [1, 1]} : vector<32x32xf32> to vector<8x32xf32>
    %cst_36 = arith.constant dense<0.000000e+00> : vector<16x32xf32>
    %81 = tpu.matmul %79, %80, %cst_36 {dimension_numbers = #tpu.dot_dimension_numbers<[1], [0], [0], [1], [0, 0, 1, 1], [], []>} : vector<16x8xf32>, vector<8x32xf32>, vector<16x32xf32> -> vector<16x32xf32>
    %82 = arith.addf %61, %81 : vector<16x32xf32>
    %83 = vector.extract_strided_slice %37 {offsets = [0, 16], sizes = [16, 8], strides = [1, 1]} : vector<16x96xf32> to vector<16x8xf32>
    %84 = vector.extract_strided_slice %37 {offsets = [0, 48], sizes = [16, 8], strides = [1, 1]} : vector<16x96xf32> to vector<16x8xf32>
    %85 = vector.extract_strided_slice %37 {offsets = [0, 80], sizes = [16, 8], strides = [1, 1]} : vector<16x96xf32> to vector<16x8xf32>
    %cst_37 = arith.constant dense<0.000000e+00> : vector<16x16xf32>
    %86 = tpu.matmul %83, %84, %cst_37 {dimension_numbers = #tpu.dot_dimension_numbers<[1], [1], [0], [0], [0, 0, 1, 0], [], []>} : vector<16x8xf32>, vector<16x8xf32>, vector<16x16xf32> -> vector<16x16xf32>
    %cst_38 = arith.constant 0.353553385 : f32
    %87 = vector.broadcast %cst_38 : f32 to vector<16x16xf32>
    %88 = arith.mulf %86, %87 : vector<16x16xf32>
    %89 = arith.addf %88, %4 : vector<16x16xf32>
    %cst_39 = arith.constant dense<0xFF800000> : vector<16xf32>
    %90 = vector.multi_reduction <maximumf>, %89, %cst_39 [1] : vector<16x16xf32> to vector<16xf32>
    %91 = vector.shape_cast %90 : vector<16xf32> to vector<16x1xf32>
    %92 = vector.broadcast %91 : vector<16x1xf32> to vector<16x16xf32>
    %93 = arith.subf %89, %92 : vector<16x16xf32>
    %94 = math.exp %93 : vector<16x16xf32>
    %cst_40 = arith.constant dense<0.000000e+00> : vector<16xf32>
    %95 = vector.multi_reduction <add>, %94, %cst_40 [1] : vector<16x16xf32> to vector<16xf32>
    %96 = vector.shape_cast %95 : vector<16xf32> to vector<16x1xf32>
    %97 = tpu.reciprocal %96 {approx = true} : vector<16x1xf32> -> vector<16x1xf32>
    %98 = vector.broadcast %97 : vector<16x1xf32> to vector<16x16xf32>
    %99 = arith.mulf %94, %98 : vector<16x16xf32>
    %cst_41 = arith.constant dense<0.000000e+00> : vector<16x8xf32>
    %100 = tpu.matmul %99, %85, %cst_41 {dimension_numbers = #tpu.dot_dimension_numbers<[1], [0], [0], [1], [0, 0, 1, 1], [], []>} : vector<16x16xf32>, vector<16x8xf32>, vector<16x8xf32> -> vector<16x8xf32>
    %101 = vector.extract_strided_slice %39 {offsets = [16, 0], sizes = [8, 32], strides = [1, 1]} : vector<32x32xf32> to vector<8x32xf32>
    %cst_42 = arith.constant dense<0.000000e+00> : vector<16x32xf32>
    %102 = tpu.matmul %100, %101, %cst_42 {dimension_numbers = #tpu.dot_dimension_numbers<[1], [0], [0], [1], [0, 0, 1, 1], [], []>} : vector<16x8xf32>, vector<8x32xf32>, vector<16x32xf32> -> vector<16x32xf32>
    %103 = arith.addf %82, %102 : vector<16x32xf32>
    %104 = vector.extract_strided_slice %37 {offsets = [0, 24], sizes = [16, 8], strides = [1, 1]} : vector<16x96xf32> to vector<16x8xf32>
    %105 = vector.extract_strided_slice %37 {offsets = [0, 56], sizes = [16, 8], strides = [1, 1]} : vector<16x96xf32> to vector<16x8xf32>
    %106 = vector.extract_strided_slice %37 {offsets = [0, 88], sizes = [16, 8], strides = [1, 1]} : vector<16x96xf32> to vector<16x8xf32>
    %cst_43 = arith.constant dense<0.000000e+00> : vector<16x16xf32>
    %107 = tpu.matmul %104, %105, %cst_43 {dimension_numbers = #tpu.dot_dimension_numbers<[1], [1], [0], [0], [0, 0, 1, 0], [], []>} : vector<16x8xf32>, vector<16x8xf32>, vector<16x16xf32> -> vector<16x16xf32>
    %cst_44 = arith.constant 0.353553385 : f32
    %108 = vector.broadcast %cst_44 : f32 to vector<16x16xf32>
    %109 = arith.mulf %107, %108 : vector<16x16xf32>
    %110 = arith.addf %109, %4 : vector<16x16xf32>
    %cst_45 = arith.constant dense<0xFF800000> : vector<16xf32>
    %111 = vector.multi_reduction <maximumf>, %110, %cst_45 [1] : vector<16x16xf32> to vector<16xf32>
    %112 = vector.shape_cast %111 : vector<16xf32> to vector<16x1xf32>
    %113 = vector.broadcast %112 : vector<16x1xf32> to vector<16x16xf32>
    %114 = arith.subf %110, %113 : vector<16x16xf32>
    %115 = math.exp %114 : vector<16x16xf32>
    %cst_46 = arith.constant dense<0.000000e+00> : vector<16xf32>
    %116 = vector.multi_reduction <add>, %115, %cst_46 [1] : vector<16x16xf32> to vector<16xf32>
    %117 = vector.shape_cast %116 : vector<16xf32> to vector<16x1xf32>
    %118 = tpu.reciprocal %117 {approx = true} : vector<16x1xf32> -> vector<16x1xf32>
    %119 = vector.broadcast %118 : vector<16x1xf32> to vector<16x16xf32>
    %120 = arith.mulf %115, %119 : vector<16x16xf32>
    %cst_47 = arith.constant dense<0.000000e+00> : vector<16x8xf32>
    %121 = tpu.matmul %120, %106, %cst_47 {dimension_numbers = #tpu.dot_dimension_numbers<[1], [0], [0], [1], [0, 0, 1, 1], [], []>} : vector<16x16xf32>, vector<16x8xf32>, vector<16x8xf32> -> vector<16x8xf32>
    %122 = vector.extract_strided_slice %39 {offsets = [24, 0], sizes = [8, 32], strides = [1, 1]} : vector<32x32xf32> to vector<8x32xf32>
    %cst_48 = arith.constant dense<0.000000e+00> : vector<16x32xf32>
    %123 = tpu.matmul %121, %122, %cst_48 {dimension_numbers = #tpu.dot_dimension_numbers<[1], [0], [0], [1], [0, 0, 1, 1], [], []>} : vector<16x8xf32>, vector<8x32xf32>, vector<16x32xf32> -> vector<16x32xf32>
    %124 = arith.addf %103, %123 : vector<16x32xf32>
    %125 = arith.addf %3, %124 : vector<16x32xf32>
    %c0_49 = arith.constant 0 : index
    %c0_50 = arith.constant 0 : index
    %c0_51 = arith.constant 0 : index
    %126 = vector.load %arg8[%c0_49, %c0_50, %c0_51] : memref<1x1x32xf32, #tpu.memory_space<vmem>>, vector<1x1x32xf32>
    %127 = vector.shape_cast %126 : vector<1x1x32xf32> to vector<1x32xf32>
    %128 = vector.broadcast %127 : vector<1x32xf32> to vector<16x32xf32>
    %129 = arith.addf %125, %128 : vector<16x32xf32>
    %c0_52 = arith.constant 0 : index
    %c0_53 = arith.constant 0 : index
    %c0_54 = arith.constant 0 : index
    %130 = vector.load %arg9[%c0_52, %c0_53, %c0_54] : memref<1x1x32xf32, #tpu.memory_space<vmem>>, vector<1x1x32xf32>
    %131 = vector.shape_cast %130 : vector<1x1x32xf32> to vector<1x32xf32>
    %c0_55 = arith.constant 0 : index
    %c0_56 = arith.constant 0 : index
    %c0_57 = arith.constant 0 : index
    %132 = vector.load %arg10[%c0_55, %c0_56, %c0_57] : memref<1x1x32xf32, #tpu.memory_space<vmem>>, vector<1x1x32xf32>
    %133 = vector.shape_cast %132 : vector<1x1x32xf32> to vector<1x32xf32>
    %cst_58 = arith.constant dense<0.000000e+00> : vector<16xf32>
    %134 = vector.multi_reduction <add>, %129, %cst_58 [1] : vector<16x32xf32> to vector<16xf32>
    %135 = vector.shape_cast %134 : vector<16xf32> to vector<16x1xf32>
    %cst_59 = arith.constant 3.200000e+01 : f32
    %136 = vector.broadcast %cst_59 : f32 to vector<16x1xf32>
    %137 = arith.divf %135, %136 : vector<16x1xf32>
    %138 = vector.broadcast %137 : vector<16x1xf32> to vector<16x32xf32>
    %139 = arith.subf %129, %138 : vector<16x32xf32>
    %140 = arith.mulf %139, %139 : vector<16x32xf32>
    %cst_60 = arith.constant dense<0.000000e+00> : vector<16xf32>
    %141 = vector.multi_reduction <add>, %140, %cst_60 [1] : vector<16x32xf32> to vector<16xf32>
    %142 = vector.shape_cast %141 : vector<16xf32> to vector<16x1xf32>
    %cst_61 = arith.constant 3.200000e+01 : f32
    %143 = vector.broadcast %cst_61 : f32 to vector<16x1xf32>
    %144 = arith.divf %142, %143 : vector<16x1xf32>
    %145 = vector.broadcast %137 : vector<16x1xf32> to vector<16x32xf32>
    %146 = arith.subf %129, %145 : vector<16x32xf32>
    %cst_62 = arith.constant 9.99999974E-6 : f32
    %147 = vector.broadcast %cst_62 : f32 to vector<16x1xf32>
    %148 = arith.addf %144, %147 : vector<16x1xf32>
    %149 = math.rsqrt %148 : vector<16x1xf32>
    %150 = vector.broadcast %149 : vector<16x1xf32> to vector<16x32xf32>
    %151 = arith.mulf %146, %150 : vector<16x32xf32>
    %152 = vector.broadcast %131 : vector<1x32xf32> to vector<16x32xf32>
    %153 = arith.mulf %151, %152 : vector<16x32xf32>
    %154 = vector.broadcast %133 : vector<1x32xf32> to vector<16x32xf32>
    %155 = arith.addf %153, %154 : vector<16x32xf32>
    %c0_63 = arith.constant 0 : index
    %c0_64 = arith.constant 0 : index
    %c0_65 = arith.constant 0 : index
    %156 = vector.load %arg11[%c0_63, %c0_64, %c0_65] : memref<1x32x128xf32, #tpu.memory_space<vmem>>, vector<1x32x128xf32>
    %157 = vector.shape_cast %156 : vector<1x32x128xf32> to vector<32x128xf32>
    %cst_66 = arith.constant dense<0.000000e+00> : vector<16x128xf32>
    %158 = tpu.matmul %155, %157, %cst_66 {dimension_numbers = #tpu.dot_dimension_numbers<[1], [0], [0], [1], [0, 0, 1, 1], [], []>} : vector<16x32xf32>, vector<32x128xf32>, vector<16x128xf32> -> vector<16x128xf32>
    %c0_67 = arith.constant 0 : index
    %c0_68 = arith.constant 0 : index
    %c0_69 = arith.constant 0 : index
    %159 = vector.load %arg12[%c0_67, %c0_68, %c0_69] : memref<1x1x128xf32, #tpu.memory_space<vmem>>, vector<1x1x128xf32>
    %160 = vector.shape_cast %159 : vector<1x1x128xf32> to vector<1x128xf32>
    %161 = vector.broadcast %160 : vector<1x128xf32> to vector<16x128xf32>
    %162 = arith.addf %158, %161 : vector<16x128xf32>
    %cst_70 = arith.constant 5.000000e-01 : f32
    %163 = vector.broadcast %cst_70 : f32 to vector<16x128xf32>
    %164 = arith.mulf %163, %162 : vector<16x128xf32>
    %cst_71 = arith.constant 4.471500e-02 : f32
    %165 = vector.broadcast %cst_71 : f32 to vector<16x128xf32>
    %166 = arith.mulf %165, %162 : vector<16x128xf32>
    %167 = arith.mulf %166, %162 : vector<16x128xf32>
    %168 = arith.mulf %167, %162 : vector<16x128xf32>
    %169 = arith.addf %162, %168 : vector<16x128xf32>
    %cst_72 = arith.constant 0.797884583 : f32
    %170 = vector.broadcast %cst_72 : f32 to vector<16x128xf32>
    %171 = arith.mulf %170, %169 : vector<16x128xf32>
    %172 = math.tanh %171 : vector<16x128xf32>
    %cst_73 = arith.constant 1.000000e+00 : f32
    %173 = vector.broadcast %cst_73 : f32 to vector<16x128xf32>
    %174 = arith.addf %173, %172 : vector<16x128xf32>
    %175 = arith.mulf %164, %174 : vector<16x128xf32>
    %c0_74 = arith.constant 0 : index
    %c0_75 = arith.constant 0 : index
    %c0_76 = arith.constant 0 : index
    %176 = vector.load %arg13[%c0_74, %c0_75, %c0_76] : memref<1x128x32xf32, #tpu.memory_space<vmem>>, vector<1x128x32xf32>
    %177 = vector.shape_cast %176 : vector<1x128x32xf32> to vector<128x32xf32>
    %cst_77 = arith.constant dense<0.000000e+00> : vector<16x32xf32>
    %178 = tpu.matmul %175, %177, %cst_77 {dimension_numbers = #tpu.dot_dimension_numbers<[1], [0], [0], [1], [0, 0, 1, 1], [], []>} : vector<16x128xf32>, vector<128x32xf32>, vector<16x32xf32> -> vector<16x32xf32>
    %179 = arith.addf %129, %178 : vector<16x32xf32>
    %c0_78 = arith.constant 0 : index
    %c0_79 = arith.constant 0 : index
    %c0_80 = arith.constant 0 : index
    %180 = vector.load %arg14[%c0_78, %c0_79, %c0_80] : memref<1x1x32xf32, #tpu.memory_space<vmem>>, vector<1x1x32xf32>
    %181 = vector.shape_cast %180 : vector<1x1x32xf32> to vector<1x32xf32>
    %182 = vector.broadcast %181 : vector<1x32xf32> to vector<16x32xf32>
    %183 = arith.addf %179, %182 : vector<16x32xf32>
    %c0_81 = arith.constant 0 : index
    %c0_82 = arith.constant 0 : index
    %184 = vector.load %arg19[%c0_81, %c0_82] : memref<16x32xf32, #tpu.memory_space<vmem>>, vector<16x32xf32>
    tpu.vector_store %arg19[%c0_81, %c0_82], %183 {strides = array<i32>} : memref<16x32xf32, #tpu.memory_space<vmem>>, vector<16x32xf32>,
    %c1_i32 = arith.constant 1 : i32
    %185 = arith.cmpi eq, %arg0, %c1_i32 : i32
    %186 = arith.extui %185 : i1 to i32
    %c0_i32_83 = arith.constant 0 : i32
    %187 = arith.cmpi ne, %186, %c0_i32_83 : i32
    scf.if %187 {
      %c0_84 = arith.constant 0 : index
      %c0_85 = arith.constant 0 : index
      %188 = vector.load %arg15[%c0_84, %c0_85] : memref<1x32xf32, #tpu.memory_space<vmem>>, vector<1x32xf32>
      %c0_86 = arith.constant 0 : index
      %c0_87 = arith.constant 0 : index
      %189 = vector.load %arg16[%c0_86, %c0_87] : memref<1x32xf32, #tpu.memory_space<vmem>>, vector<1x32xf32>
      %cst_88 = arith.constant dense<0.000000e+00> : vector<16xf32>
      %190 = vector.multi_reduction <add>, %183, %cst_88 [1] : vector<16x32xf32> to vector<16xf32>
      %191 = vector.shape_cast %190 : vector<16xf32> to vector<16x1xf32>
      %cst_89 = arith.constant 3.200000e+01 : f32
      %192 = vector.broadcast %cst_89 : f32 to vector<16x1xf32>
      %193 = arith.divf %191, %192 : vector<16x1xf32>
      %194 = vector.broadcast %193 : vector<16x1xf32> to vector<16x32xf32>
      %195 = arith.subf %183, %194 : vector<16x32xf32>
      %196 = arith.mulf %195, %195 : vector<16x32xf32>
      %cst_90 = arith.constant dense<0.000000e+00> : vector<16xf32>
      %197 = vector.multi_reduction <add>, %196, %cst_90 [1] : vector<16x32xf32> to vector<16xf32>
      %198 = vector.shape_cast %197 : vector<16xf32> to vector<16x1xf32>
      %cst_91 = arith.constant 3.200000e+01 : f32
      %199 = vector.broadcast %cst_91 : f32 to vector<16x1xf32>
      %200 = arith.divf %198, %199 : vector<16x1xf32>
      %201 = vector.broadcast %193 : vector<16x1xf32> to vector<16x32xf32>
      %202 = arith.subf %183, %201 : vector<16x32xf32>
      %cst_92 = arith.constant 9.99999974E-6 : f32
      %203 = vector.broadcast %cst_92 : f32 to vector<16x1xf32>
      %204 = arith.addf %200, %203 : vector<16x1xf32>
      %205 = math.rsqrt %204 : vector<16x1xf32>
      %206 = vector.broadcast %205 : vector<16x1xf32> to vector<16x32xf32>
      %207 = arith.mulf %202, %206 : vector<16x32xf32>
      %208 = vector.broadcast %188 : vector<1x32xf32> to vector<16x32xf32>
      %209 = arith.mulf %207, %208 : vector<16x32xf32>
      %210 = vector.broadcast %189 : vector<1x32xf32> to vector<16x32xf32>
      %211 = arith.addf %209, %210 : vector<16x32xf32>
      %c0_93 = arith.constant 0 : index
      %c0_94 = arith.constant 0 : index
      %212 = vector.load %arg17[%c0_93, %c0_94] : memref<32x128xf32, #tpu.memory_space<vmem>>, vector<32x128xf32>
      %cst_95 = arith.constant dense<0.000000e+00> : vector<16x128xf32>
      %213 = tpu.matmul %211, %212, %cst_95 {dimension_numbers = #tpu.dot_dimension_numbers<[1], [0], [0], [1], [0, 0, 1, 1], [], []>} : vector<16x32xf32>, vector<32x128xf32>, vector<16x128xf32> -> vector<16x128xf32>
      %c0_96 = arith.constant 0 : index
      %c0_97 = arith.constant 0 : index
      %214 = vector.load %arg18[%c0_96, %c0_97] : memref<16x128xf32, #tpu.memory_space<vmem>>, vector<16x128xf32>
      tpu.vector_store %arg18[%c0_96, %c0_97], %213 {strides = array<i32>} : memref<16x128xf32, #tpu.memory_space<vmem>>, vector<16x128xf32>,
    } else {
    }
    return
  }
  func.func @transform_0(%arg0: i32) -> (i32, i32) {
    %c0_i32 = arith.constant 0 : i32
    %c0_i32_0 = arith.constant 0 : i32
    %c0_i32_1 = arith.constant 0 : i32
    return %c0_i32, %c0_i32_0 : i32, i32
  }
  func.func @transform_1(%arg0: i32) -> (i32, i32) {
    %c0_i32 = arith.constant 0 : i32
    %c0_i32_0 = arith.constant 0 : i32
    %c0_i32_1 = arith.constant 0 : i32
    return %c0_i32, %c0_i32_0 : i32, i32
  }
  func.func @transform_2(%arg0: i32) -> (i32, i32, i32) {
    %c0_i32 = arith.constant 0 : i32
    %c0_i32_0 = arith.constant 0 : i32
    %c0_i32_1 = arith.constant 0 : i32
    return %arg0, %c0_i32, %c0_i32_0 : i32, i32, i32
  }
  func.func @transform_3(%arg0: i32) -> (i32, i32, i32) {
    %c0_i32 = arith.constant 0 : i32
    %c0_i32_0 = arith.constant 0 : i32
    %c0_i32_1 = arith.constant 0 : i32
    return %arg0, %c0_i32, %c0_i32_0 : i32, i32, i32
  }
  func.func @transform_4(%arg0: i32) -> (i32, i32, i32) {
    %c0_i32 = arith.constant 0 : i32
    %c0_i32_0 = arith.constant 0 : i32
    %c0_i32_1 = arith.constant 0 : i32
    return %arg0, %c0_i32, %c0_i32_0 : i32, i32, i32
  }
  func.func @transform_5(%arg0: i32) -> (i32, i32, i32) {
    %c0_i32 = arith.constant 0 : i32
    %c0_i32_0 = arith.constant 0 : i32
    %c0_i32_1 = arith.constant 0 : i32
    return %arg0, %c0_i32, %c0_i32_0 : i32, i32, i32
  }
  func.func @transform_6(%arg0: i32) -> (i32, i32, i32) {
    %c0_i32 = arith.constant 0 : i32
    %c0_i32_0 = arith.constant 0 : i32
    %c0_i32_1 = arith.constant 0 : i32
    return %arg0, %c0_i32, %c0_i32_0 : i32, i32, i32
  }
  func.func @transform_7(%arg0: i32) -> (i32, i32, i32) {
    %c0_i32 = arith.constant 0 : i32
    %c0_i32_0 = arith.constant 0 : i32
    %c0_i32_1 = arith.constant 0 : i32
    return %arg0, %c0_i32, %c0_i32_0 : i32, i32, i32
  }
  func.func @transform_8(%arg0: i32) -> (i32, i32, i32) {
    %c0_i32 = arith.constant 0 : i32
    %c0_i32_0 = arith.constant 0 : i32
    %c0_i32_1 = arith.constant 0 : i32
    return %arg0, %c0_i32, %c0_i32_0 : i32, i32, i32
  }
  func.func @transform_9(%arg0: i32) -> (i32, i32, i32) {
    %c0_i32 = arith.constant 0 : i32
    %c0_i32_0 = arith.constant 0 : i32
    %c0_i32_1 = arith.constant 0 : i32
    return %arg0, %c0_i32, %c0_i32_0 : i32, i32, i32
  }
  func.func @transform_10(%arg0: i32) -> (i32, i32, i32) {
    %c0_i32 = arith.constant 0 : i32
    %c0_i32_0 = arith.constant 0 : i32
    %c0_i32_1 = arith.constant 0 : i32
    return %arg0, %c0_i32, %c0_i32_0 : i32, i32, i32
  }
  func.func @transform_11(%arg0: i32) -> (i32, i32, i32) {
    %c0_i32 = arith.constant 0 : i32
    %c0_i32_0 = arith.constant 0 : i32
    %c0_i32_1 = arith.constant 0 : i32
    return %arg0, %c0_i32, %c0_i32_0 : i32, i32, i32
  }
  func.func @transform_12(%arg0: i32) -> (i32, i32, i32) {
    %c0_i32 = arith.constant 0 : i32
    %c0_i32_0 = arith.constant 0 : i32
    %c0_i32_1 = arith.constant 0 : i32
    return %arg0, %c0_i32, %c0_i32_0 : i32, i32, i32
  }
  func.func @transform_13(%arg0: i32) -> (i32, i32, i32) {
    %c0_i32 = arith.constant 0 : i32
    %c0_i32_0 = arith.constant 0 : i32
    %c0_i32_1 = arith.constant 0 : i32
    return %arg0, %c0_i32, %c0_i32_0 : i32, i32, i32
  }
  func.func @transform_14(%arg0: i32) -> (i32, i32) {
    %c0_i32 = arith.constant 0 : i32
    %c0_i32_0 = arith.constant 0 : i32
    %c0_i32_1 = arith.constant 0 : i32
    return %c0_i32, %c0_i32_0 : i32, i32
  }
  func.func @transform_15(%arg0: i32) -> (i32, i32) {
    %c0_i32 = arith.constant 0 : i32
    %c0_i32_0 = arith.constant 0 : i32
    %c0_i32_1 = arith.constant 0 : i32
    return %c0_i32, %c0_i32_0 : i32, i32
  }
  func.func @transform_16(%arg0: i32) -> (i32, i32) {
    %c0_i32 = arith.constant 0 : i32
    %c0_i32_0 = arith.constant 0 : i32
    %c0_i32_1 = arith.constant 0 : i32
    return %c0_i32, %c0_i32_0 : i32, i32
  }
  func.func @transform_17(%arg0: i32) -> (i32, i32) {
    %c0_i32 = arith.constant 0 : i32
    %c0_i32_0 = arith.constant 0 : i32
    %c0_i32_1 = arith.constant 0 : i32
    return %c0_i32, %c0_i32_0 : i32, i32
  }
}

</mosaic_0001>

<llo_original>
// kernel: _lambda_.1
$region0: #{_lambda_.1}
  #allocation0 [shape = 'u32[]', space=smem, size = 0x4, offset = 0x4, fixed_abs, tag = 'smem constant byte address 0x4 - core index']
  #allocation1 [shape = 'u32[144,128]{1,0:T(1,128)}', space=vmem, size = 0x12000, scoped, tag = 'internal scratch']
  #allocation2 [shape = 'f32[16,32]{1,0:T(8,128)}', space=vmem, size = 0x2000, scoped, tag = 'scratch operand']
  %s0 = inlined_call_operand.vmem [shape: f32[16,32], index: 0, kind: input, shape index: {}]
  %s1 = inlined_call_operand.vmem [shape: f32[16,16], index: 1, kind: input, shape index: {}]
  %s2 = inlined_call_operand.vmem [shape: f32[2,1,32], index: 2, kind: input, shape index: {}]
  %s3 = inlined_call_operand.vmem [shape: f32[2,1,32], index: 3, kind: input, shape index: {}]
  %s4 = inlined_call_operand.vmem [shape: f32[2,32,96], index: 4, kind: input, shape index: {}]
  %s5 = inlined_call_operand.vmem [shape: f32[2,1,96], index: 5, kind: input, shape index: {}]
  %s6 = inlined_call_operand.vmem [shape: f32[2,32,32], index: 6, kind: input, shape index: {}]
  %s7 = inlined_call_operand.vmem [shape: f32[2,1,32], index: 7, kind: input, shape index: {}]
  %s8 = inlined_call_operand.vmem [shape: f32[2,1,32], index: 8, kind: input, shape index: {}]
  %s9 = inlined_call_operand.vmem [shape: f32[2,1,32], index: 9, kind: input, shape index: {}]
  %s10 = inlined_call_operand.vmem [shape: f32[2,32,128], index: 10, kind: input, shape index: {}]
  %s11 = inlined_call_operand.vmem [shape: f32[2,1,128], index: 11, kind: input, shape index: {}]
  %s12 = inlined_call_operand.vmem [shape: f32[2,128,32], index: 12, kind: input, shape index: {}]
  %s13 = inlined_call_operand.vmem [shape: f32[2,1,32], index: 13, kind: input, shape index: {}]
  %s14 = inlined_call_operand.vmem [shape: f32[1,32], index: 14, kind: input, shape index: {}]
  %s15 = inlined_call_operand.vmem [shape: f32[1,32], index: 15, kind: input, shape index: {}]
  %s16 = inlined_call_operand.vmem [shape: f32[32,128], index: 16, kind: input, shape index: {}]
  %s17 = inlined_call_operand.vmem [shape: f32[16,128], index: 17, kind: output, shape index: {}]
  %s18 = sld [smem:[#allocation0]]
  $region109: #{_lambda_.1} parent=0
    _
  %s20 = ssub.s32 1, %s18
  %s21 = scalar_select 0, %s20, %s18
  loop: start=0, step=1, limit=4
  $region2: #{_lambda_.1} parent=0 // loop_pre_header
    _
  $region3: #{_lambda_.1} parent=0 // loop_header
    %s23 = sphi 0, %s27
    %p24 = scmp.ge.s32.totalorder %s23, 4
    %s31 = sphi 0, %s31
    %s33 = sphi 0, %s31
    %s34 = sphi 0, %s33
    %s48 = sphi 0, %s34
    %s52 = sphi 0, %s52
    %s54 = sphi 0, %s52
    %s55 = sphi 0, %s54
    %s69 = sphi 0, %s55
    %s75 = sphi 0, %s77
    %s78 = sphi 0, %s75
    %s79 = sphi 0, %s78
    %s95 = sphi 0, %s79
    %s101 = sphi 0, %s103
    %s104 = sphi 0, %s101
    %s105 = sphi 0, %s104
    %s121 = sphi 0, %s105
    %s127 = sphi 0, %s129
    %s130 = sphi 0, %s127
    %s131 = sphi 0, %s130
    %s147 = sphi 0, %s131
    %s153 = sphi 0, %s155
    %s156 = sphi 0, %s153
    %s157 = sphi 0, %s156
    %s173 = sphi 0, %s157
    %s179 = sphi 0, %s181
    %s182 = sphi 0, %s179
    %s183 = sphi 0, %s182
    %s199 = sphi 0, %s183
    %s205 = sphi 0, %s207
    %s208 = sphi 0, %s205
    %s209 = sphi 0, %s208
    %s225 = sphi 0, %s209
    %s231 = sphi 0, %s233
    %s234 = sphi 0, %s231
    %s235 = sphi 0, %s234
    %s251 = sphi 0, %s235
    %s257 = sphi 0, %s259
    %s260 = sphi 0, %s257
    %s261 = sphi 0, %s260
    %s277 = sphi 0, %s261
    %s283 = sphi 0, %s285
    %s286 = sphi 0, %s283
    %s287 = sphi 0, %s286
    %s303 = sphi 0, %s287
    %s309 = sphi 0, %s311
    %s312 = sphi 0, %s309
    %s313 = sphi 0, %s312
    %s329 = sphi 0, %s313
    %s335 = sphi 0, %s337
    %s338 = sphi 0, %s335
    %s339 = sphi 0, %s338
    %s355 = sphi 0, %s339
    %s361 = sphi 0, %s363
    %s364 = sphi 0, %s361
    %s365 = sphi 0, %s364
    %s381 = sphi 0, %s365
    %s385 = sphi 0, %s385
    %s387 = sphi 0, %s385
    %s388 = sphi 0, %s387
    %s402 = sphi 0, %s388
    %s406 = sphi 0, %s406
    %s408 = sphi 0, %s406
    %s409 = sphi 0, %s408
    %s423 = sphi 0, %s409
    %s427 = sphi 0, %s427
    %s429 = sphi 0, %s427
    %s430 = sphi 0, %s429
    %s444 = sphi 0, %s430
    %s448 = sphi 0, %s448
    %s450 = sphi 0, %s448
    %s451 = sphi 0, %s450
    %s465 = sphi 0, %s451
  $region4: #{_lambda_.1} parent=0 // loop_header_branch
    %26 = sbr.rel (%p24) target = $region8
  $region5: #{_lambda_.1} parent=0 // loop_body
    %s28 = ssub.s32 %s23, 1
    %s29 = ssub.s32 %s23, 2
    %s30 = sadd.s32 %s23, 1
    %s32 = sadd.s32 %s31, 1
    %p35 = scmp.eq.s32.totalorder %s23, 1
    %p36 = scmp.ne.s32.totalorder %s31, %s33
    %p37 = scmp.eq.s32.totalorder %s23, 0
    %p38 = por %p36, %p37
    %p39 = scmp.ne.s32.totalorder %s31, %s33
    %p40 = scmp.eq.s32.totalorder %s28, 1
    %p41 = por %p39, %p40
    %p42 = scmp.ne.s32.totalorder %s33, %s34
    %p43 = scmp.eq.s32.totalorder %s28, 0
    %p44 = por %p42, %p43
    %p45 = scmp.ne.s32.totalorder %s33, %s34
    %p46 = scmp.eq.s32.totalorder %s29, 1
    %p47 = por %p45, %p46
    %p49 = scmp.ne.s32.totalorder %s34, %s48
    %p50 = scmp.eq.s32.totalorder %s29, 0
    %p51 = por %p49, %p50
    %s53 = sadd.s32 %s52, 1
    %p56 = scmp.eq.s32.totalorder %s23, 1
    %p57 = scmp.ne.s32.totalorder %s52, %s54
    %p58 = scmp.eq.s32.totalorder %s23, 0
    %p59 = por %p57, %p58
    %p60 = scmp.ne.s32.totalorder %s52, %s54
    %p61 = scmp.eq.s32.totalorder %s28, 1
    %p62 = por %p60, %p61
    %p63 = scmp.ne.s32.totalorder %s54, %s55
    %p64 = scmp.eq.s32.totalorder %s28, 0
    %p65 = por %p63, %p64
    %p66 = scmp.ne.s32.totalorder %s54, %s55
    %p67 = scmp.eq.s32.totalorder %s29, 1
    %p68 = por %p66, %p67
    %p70 = scmp.ne.s32.totalorder %s55, %s69
    %p71 = scmp.eq.s32.totalorder %s29, 0
    %p72 = por %p70, %p71
    %s73 = ssub.s32 %s23, %s30
    %p74 = scmp.eq.s32.totalorder %s73, 0
    %s76 = sadd.s32 %s75, 1
    %s77 = scalar_select %p74, %s75, %s76
    %p80 = pneg %p74
    %p81 = scmp.eq.s32.totalorder %s23, 1
    %p82 = por %p80, %p81
    %p83 = scmp.ne.s32.totalorder %s75, %s78
    %p84 = scmp.eq.s32.totalorder %s23, 0
    %p85 = por %p83, %p84
    %p86 = scmp.ne.s32.totalorder %s75, %s78
    %p87 = scmp.eq.s32.totalorder %s28, 1
    %p88 = por %p86, %p87
    %p89 = scmp.ne.s32.totalorder %s78, %s79
    %p90 = scmp.eq.s32.totalorder %s28, 0
    %p91 = por %p89, %p90
    %p92 = scmp.ne.s32.totalorder %s78, %s79
    %p93 = scmp.eq.s32.totalorder %s29, 1
    %p94 = por %p92, %p93
    %p96 = scmp.ne.s32.totalorder %s79, %s95
    %p97 = scmp.eq.s32.totalorder %s29, 0
    %p98 = por %p96, %p97
    %s99 = ssub.s32 %s23, %s30
    %p100 = scmp.eq.s32.totalorder %s99, 0
    %s102 = sadd.s32 %s101, 1
    %s103 = scalar_select %p100, %s101, %s102
    %p106 = pneg %p100
    %p107 = scmp.eq.s32.totalorder %s23, 1
    %p108 = por %p106, %p107
    %p109 = scmp.ne.s32.totalorder %s101, %s104
    %p110 = scmp.eq.s32.totalorder %s23, 0
    %p111 = por %p109, %p110
    %p112 = scmp.ne.s32.totalorder %s101, %s104
    %p113 = scmp.eq.s32.totalorder %s28, 1
    %p114 = por %p112, %p113
    %p115 = scmp.ne.s32.totalorder %s104, %s105
    %p116 = scmp.eq.s32.totalorder %s28, 0
    %p117 = por %p115, %p116
    %p118 = scmp.ne.s32.totalorder %s104, %s105
    %p119 = scmp.eq.s32.totalorder %s29, 1
    %p120 = por %p118, %p119
    %p122 = scmp.ne.s32.totalorder %s105, %s121
    %p123 = scmp.eq.s32.totalorder %s29, 0
    %p124 = por %p122, %p123
    %s125 = ssub.s32 %s23, %s30
    %p126 = scmp.eq.s32.totalorder %s125, 0
    %s128 = sadd.s32 %s127, 1
    %s129 = scalar_select %p126, %s127, %s128
    %p132 = pneg %p126
    %p133 = scmp.eq.s32.totalorder %s23, 1
    %p134 = por %p132, %p133
    %p135 = scmp.ne.s32.totalorder %s127, %s130
    %p136 = scmp.eq.s32.totalorder %s23, 0
    %p137 = por %p135, %p136
    %p138 = scmp.ne.s32.totalorder %s127, %s130
    %p139 = scmp.eq.s32.totalorder %s28, 1
    %p140 = por %p138, %p139
    %p141 = scmp.ne.s32.totalorder %s130, %s131
    %p142 = scmp.eq.s32.totalorder %s28, 0
    %p143 = por %p141, %p142
    %p144 = scmp.ne.s32.totalorder %s130, %s131
    %p145 = scmp.eq.s32.totalorder %s29, 1
    %p146 = por %p144, %p145
    %p148 = scmp.ne.s32.totalorder %s131, %s147
    %p149 = scmp.eq.s32.totalorder %s29, 0
    %p150 = por %p148, %p149
    %s151 = ssub.s32 %s23, %s30
    %p152 = scmp.eq.s32.totalorder %s151, 0
    %s154 = sadd.s32 %s153, 1
    %s155 = scalar_select %p152, %s153, %s154
    %p158 = pneg %p152
    %p159 = scmp.eq.s32.totalorder %s23, 1
    %p160 = por %p158, %p159
    %p161 = scmp.ne.s32.totalorder %s153, %s156
    %p162 = scmp.eq.s32.totalorder %s23, 0
    %p163 = por %p161, %p162
    %p164 = scmp.ne.s32.totalorder %s153, %s156
    %p165 = scmp.eq.s32.totalorder %s28, 1
    %p166 = por %p164, %p165
    %p167 = scmp.ne.s32.totalorder %s156, %s157
    %p168 = scmp.eq.s32.totalorder %s28, 0
    %p169 = por %p167, %p168
    %p170 = scmp.ne.s32.totalorder %s156, %s157
    %p171 = scmp.eq.s32.totalorder %s29, 1
    %p172 = por %p170, %p171
    %p174 = scmp.ne.s32.totalorder %s157, %s173
    %p175 = scmp.eq.s32.totalorder %s29, 0
    %p176 = por %p174, %p175
    %s177 = ssub.s32 %s23, %s30
    %p178 = scmp.eq.s32.totalorder %s177, 0
    %s180 = sadd.s32 %s179, 1
    %s181 = scalar_select %p178, %s179, %s180
    %p184 = pneg %p178
    %p185 = scmp.eq.s32.totalorder %s23, 1
    %p186 = por %p184, %p185
    %p187 = scmp.ne.s32.totalorder %s179, %s182
    %p188 = scmp.eq.s32.totalorder %s23, 0
    %p189 = por %p187, %p188
    %p190 = scmp.ne.s32.totalorder %s179, %s182
    %p191 = scmp.eq.s32.totalorder %s28, 1
    %p192 = por %p190, %p191
    %p193 = scmp.ne.s32.totalorder %s182, %s183
    %p194 = scmp.eq.s32.totalorder %s28, 0
    %p195 = por %p193, %p194
    %p196 = scmp.ne.s32.totalorder %s182, %s183
    %p197 = scmp.eq.s32.totalorder %s29, 1
    %p198 = por %p196, %p197
    %p200 = scmp.ne.s32.totalorder %s183, %s199
    %p201 = scmp.eq.s32.totalorder %s29, 0
    %p202 = por %p200, %p201
    %s203 = ssub.s32 %s23, %s30
    %p204 = scmp.eq.s32.totalorder %s203, 0
    %s206 = sadd.s32 %s205, 1
    %s207 = scalar_select %p204, %s205, %s206
    %p210 = pneg %p204
    %p211 = scmp.eq.s32.totalorder %s23, 1
    %p212 = por %p210, %p211
    %p213 = scmp.ne.s32.totalorder %s205, %s208
    %p214 = scmp.eq.s32.totalorder %s23, 0
    %p215 = por %p213, %p214
    %p216 = scmp.ne.s32.totalorder %s205, %s208
    %p217 = scmp.eq.s32.totalorder %s28, 1
    %p218 = por %p216, %p217
    %p219 = scmp.ne.s32.totalorder %s208, %s209
    %p220 = scmp.eq.s32.totalorder %s28, 0
    %p221 = por %p219, %p220
    %p222 = scmp.ne.s32.totalorder %s208, %s209
    %p223 = scmp.eq.s32.totalorder %s29, 1
    %p224 = por %p222, %p223
    %p226 = scmp.ne.s32.totalorder %s209, %s225
    %p227 = scmp.eq.s32.totalorder %s29, 0
    %p228 = por %p226, %p227
    %s229 = ssub.s32 %s23, %s30
    %p230 = scmp.eq.s32.totalorder %s229, 0
    %s232 = sadd.s32 %s231, 1
    %s233 = scalar_select %p230, %s231, %s232
    %p236 = pneg %p230
    %p237 = scmp.eq.s32.totalorder %s23, 1
    %p238 = por %p236, %p237
    %p239 = scmp.ne.s32.totalorder %s231, %s234
    %p240 = scmp.eq.s32.totalorder %s23, 0
    %p241 = por %p239, %p240
    %p242 = scmp.ne.s32.totalorder %s231, %s234
    %p243 = scmp.eq.s32.totalorder %s28, 1
    %p244 = por %p242, %p243
    %p245 = scmp.ne.s32.totalorder %s234, %s235
    %p246 = scmp.eq.s32.totalorder %s28, 0
    %p247 = por %p245, %p246
    %p248 = scmp.ne.s32.totalorder %s234, %s235
    %p249 = scmp.eq.s32.totalorder %s29, 1
    %p250 = por %p248, %p249
    %p252 = scmp.ne.s32.totalorder %s235, %s251
    %p253 = scmp.eq.s32.totalorder %s29, 0
    %p254 = por %p252, %p253
    %s255 = ssub.s32 %s23, %s30
    %p256 = scmp.eq.s32.totalorder %s255, 0
    %s258 = sadd.s32 %s257, 1
    %s259 = scalar_select %p256, %s257, %s258
    %p262 = pneg %p256
    %p263 = scmp.eq.s32.totalorder %s23, 1
    %p264 = por %p262, %p263
    %p265 = scmp.ne.s32.totalorder %s257, %s260
    %p266 = scmp.eq.s32.totalorder %s23, 0
    %p267 = por %p265, %p266
    %p268 = scmp.ne.s32.totalorder %s257, %s260
    %p269 = scmp.eq.s32.totalorder %s28, 1
    %p270 = por %p268, %p269
    %p271 = scmp.ne.s32.totalorder %s260, %s261
    %p272 = scmp.eq.s32.totalorder %s28, 0
    %p273 = por %p271, %p272
    %p274 = scmp.ne.s32.totalorder %s260, %s261
    %p275 = scmp.eq.s32.totalorder %s29, 1
    %p276 = por %p274, %p275
    %p278 = scmp.ne.s32.totalorder %s261, %s277
    %p279 = scmp.eq.s32.totalorder %s29, 0
    %p280 = por %p278, %p279
    %s281 = ssub.s32 %s23, %s30
    %p282 = scmp.eq.s32.totalorder %s281, 0
    %s284 = sadd.s32 %s283, 1
    %s285 = scalar_select %p282, %s283, %s284
    %p288 = pneg %p282
    %p289 = scmp.eq.s32.totalorder %s23, 1
    %p290 = por %p288, %p289
    %p291 = scmp.ne.s32.totalorder %s283, %s286
    %p292 = scmp.eq.s32.totalorder %s23, 0
    %p293 = por %p291, %p292
    %p294 = scmp.ne.s32.totalorder %s283, %s286
    %p295 = scmp.eq.s32.totalorder %s28, 1
    %p296 = por %p294, %p295
    %p297 = scmp.ne.s32.totalorder %s286, %s287
    %p298 = scmp.eq.s32.totalorder %s28, 0
    %p299 = por %p297, %p298
    %p300 = scmp.ne.s32.totalorder %s286, %s287
    %p301 = scmp.eq.s32.totalorder %s29, 1
    %p302 = por %p300, %p301
    %p304 = scmp.ne.s32.totalorder %s287, %s303
    %p305 = scmp.eq.s32.totalorder %s29, 0
    %p306 = por %p304, %p305
    %s307 = ssub.s32 %s23, %s30
    %p308 = scmp.eq.s32.totalorder %s307, 0
    %s310 = sadd.s32 %s309, 1
    %s311 = scalar_select %p308, %s309, %s310
    %p314 = pneg %p308
    %p315 = scmp.eq.s32.totalorder %s23, 1
    %p316 = por %p314, %p315
    %p317 = scmp.ne.s32.totalorder %s309, %s312
    %p318 = scmp.eq.s32.totalorder %s23, 0
    %p319 = por %p317, %p318
    %p320 = scmp.ne.s32.totalorder %s309, %s312
    %p321 = scmp.eq.s32.totalorder %s28, 1
    %p322 = por %p320, %p321
    %p323 = scmp.ne.s32.totalorder %s312, %s313
    %p324 = scmp.eq.s32.totalorder %s28, 0
    %p325 = por %p323, %p324
    %p326 = scmp.ne.s32.totalorder %s312, %s313
    %p327 = scmp.eq.s32.totalorder %s29, 1
    %p328 = por %p326, %p327
    %p330 = scmp.ne.s32.totalorder %s313, %s329
    %p331 = scmp.eq.s32.totalorder %s29, 0
    %p332 = por %p330, %p331
    %s333 = ssub.s32 %s23, %s30
    %p334 = scmp.eq.s32.totalorder %s333, 0
    %s336 = sadd.s32 %s335, 1
    %s337 = scalar_select %p334, %s335, %s336
    %p340 = pneg %p334
    %p341 = scmp.eq.s32.totalorder %s23, 1
    %p342 = por %p340, %p341
    %p343 = scmp.ne.s32.totalorder %s335, %s338
    %p344 = scmp.eq.s32.totalorder %s23, 0
    %p345 = por %p343, %p344
    %p346 = scmp.ne.s32.totalorder %s335, %s338
    %p347 = scmp.eq.s32.totalorder %s28, 1
    %p348 = por %p346, %p347
    %p349 = scmp.ne.s32.totalorder %s338, %s339
    %p350 = scmp.eq.s32.totalorder %s28, 0
    %p351 = por %p349, %p350
    %p352 = scmp.ne.s32.totalorder %s338, %s339
    %p353 = scmp.eq.s32.totalorder %s29, 1
    %p354 = por %p352, %p353
    %p356 = scmp.ne.s32.totalorder %s339, %s355
    %p357 = scmp.eq.s32.totalorder %s29, 0
    %p358 = por %p356, %p357
    %s359 = ssub.s32 %s23, %s30
    %p360 = scmp.eq.s32.totalorder %s359, 0
    %s362 = sadd.s32 %s361, 1
    %s363 = scalar_select %p360, %s361, %s362
    %p366 = pneg %p360
    %p367 = scmp.eq.s32.totalorder %s23, 1
    %p368 = por %p366, %p367
    %p369 = scmp.ne.s32.totalorder %s361, %s364
    %p370 = scmp.eq.s32.totalorder %s23, 0
    %p371 = por %p369, %p370
    %p372 = scmp.ne.s32.totalorder %s361, %s364
    %p373 = scmp.eq.s32.totalorder %s28, 1
    %p374 = por %p372, %p373
    %p375 = scmp.ne.s32.totalorder %s364, %s365
    %p376 = scmp.eq.s32.totalorder %s28, 0
    %p377 = por %p375, %p376
    %p378 = scmp.ne.s32.totalorder %s364, %s365
    %p379 = scmp.eq.s32.totalorder %s29, 1
    %p380 = por %p378, %p379
    %p382 = scmp.ne.s32.totalorder %s365, %s381
    %p383 = scmp.eq.s32.totalorder %s29, 0
    %p384 = por %p382, %p383
    %s386 = sadd.s32 %s385, 1
    %p389 = scmp.eq.s32.totalorder %s23, 1
    %p390 = scmp.ne.s32.totalorder %s385, %s387
    %p391 = scmp.eq.s32.totalorder %s23, 0
    %p392 = por %p390, %p391
    %p393 = scmp.ne.s32.totalorder %s385, %s387
    %p394 = scmp.eq.s32.totalorder %s28, 1
    %p395 = por %p393, %p394
    %p396 = scmp.ne.s32.totalorder %s387, %s388
    %p397 = scmp.eq.s32.totalorder %s28, 0
    %p398 = por %p396, %p397
    %p399 = scmp.ne.s32.totalorder %s387, %s388
    %p400 = scmp.eq.s32.totalorder %s29, 1
    %p401 = por %p399, %p400
    %p403 = scmp.ne.s32.totalorder %s388, %s402
    %p404 = scmp.eq.s32.totalorder %s29, 0
    %p405 = por %p403, %p404
    %s407 = sadd.s32 %s406, 1
    %p410 = scmp.eq.s32.totalorder %s23, 1
    %p411 = scmp.ne.s32.totalorder %s406, %s408
    %p412 = scmp.eq.s32.totalorder %s23, 0
    %p413 = por %p411, %p412
    %p414 = scmp.ne.s32.totalorder %s406, %s408
    %p415 = scmp.eq.s32.totalorder %s28, 1
    %p416 = por %p414, %p415
    %p417 = scmp.ne.s32.totalorder %s408, %s409
    %p418 = scmp.eq.s32.totalorder %s28, 0
    %p419 = por %p417, %p418
    %p420 = scmp.ne.s32.totalorder %s408, %s409
    %p421 = scmp.eq.s32.totalorder %s29, 1
    %p422 = por %p420, %p421
    %p424 = scmp.ne.s32.totalorder %s409, %s423
    %p425 = scmp.eq.s32.totalorder %s29, 0
    %p426 = por %p424, %p425
    %s428 = sadd.s32 %s427, 1
    %p431 = scmp.eq.s32.totalorder %s23, 1
    %p432 = scmp.ne.s32.totalorder %s427, %s429
    %p433 = scmp.eq.s32.totalorder %s23, 0
    %p434 = por %p432, %p433
    %p435 = scmp.ne.s32.totalorder %s427, %s429
    %p436 = scmp.eq.s32.totalorder %s28, 1
    %p437 = por %p435, %p436
    %p438 = scmp.ne.s32.totalorder %s429, %s430
    %p439 = scmp.eq.s32.totalorder %s28, 0
    %p440 = por %p438, %p439
    %p441 = scmp.ne.s32.totalorder %s429, %s430
    %p442 = scmp.eq.s32.totalorder %s29, 1
    %p443 = por %p441, %p442
    %p445 = scmp.ne.s32.totalorder %s430, %s444
    %p446 = scmp.eq.s32.totalorder %s29, 0
    %p447 = por %p445, %p446
    %s449 = sadd.s32 %s448, 1
    %p452 = scmp.eq.s32.totalorder %s23, 1
    %p453 = scmp.ne.s32.totalorder %s448, %s450
    %p454 = scmp.eq.s32.totalorder %s23, 0
    %p455 = por %p453, %p454
    %p456 = scmp.ne.s32.totalorder %s448, %s450
    %p457 = scmp.eq.s32.totalorder %s28, 1
    %p458 = por %p456, %p457
    %p459 = scmp.ne.s32.totalorder %s450, %s451
    %p460 = scmp.eq.s32.totalorder %s28, 0
    %p461 = por %p459, %p460
    %p462 = scmp.ne.s32.totalorder %s450, %s451
    %p463 = scmp.eq.s32.totalorder %s29, 1
    %p464 = por %p462, %p463
    %p466 = scmp.ne.s32.totalorder %s451, %s465
    %p467 = scmp.eq.s32.totalorder %s29, 0
    %p468 = por %p466, %p467
    %p469 = scmp.le.s32.totalorder 1, %s23
    %p470 = scmp.lt.s32.totalorder %s23, 3
    %p471 = pnand %p469, %p470
    %p472 = pneg %p471
    // Predicated region
    $region9: #{_lambda_.1} parent=5 // pred_check
      _
    $region10: #{_lambda_.1} parent=5 // pred_check_branch
      %474 = sbr.rel (%p471) target = $region12
    $region11: #{_lambda_.1} parent=5 // pred_region
      %s475 = ssub.s32 %s23, 1
      // Predicated region
      $region13: #{_lambda_.1} parent=11 // pred_check
        %p476 = pneg %p44
      $region14: #{_lambda_.1} parent=11 // pred_check_branch
        %478 = sbr.rel (%p476) target = $region16
      $region15: #{_lambda_.1} parent=11 // pred_region
        _
      $region16: #{_lambda_.1} parent=11 // pred_fallthru
        _
      // Predicated region
      $region17: #{_lambda_.1} parent=11 // pred_check
        %p479 = pneg %p65
      $region18: #{_lambda_.1} parent=11 // pred_check_branch
        %481 = sbr.rel (%p479) target = $region20
      $region19: #{_lambda_.1} parent=11 // pred_region
        _
      $region20: #{_lambda_.1} parent=11 // pred_fallthru
        _
      // Predicated region
      $region21: #{_lambda_.1} parent=11 // pred_check
        %p482 = pneg %p398
      $region22: #{_lambda_.1} parent=11 // pred_check_branch
        %484 = sbr.rel (%p482) target = $region24
      $region23: #{_lambda_.1} parent=11 // pred_region
        _
      $region24: #{_lambda_.1} parent=11 // pred_fallthru
        _
      // Predicated region
      $region25: #{_lambda_.1} parent=11 // pred_check
        %p485 = pneg %p419
      $region26: #{_lambda_.1} parent=11 // pred_check_branch
        %487 = sbr.rel (%p485) target = $region28
      $region27: #{_lambda_.1} parent=11 // pred_region
        _
      $region28: #{_lambda_.1} parent=11 // pred_fallthru
        _
      // Predicated region
      $region29: #{_lambda_.1} parent=11 // pred_check
        %p488 = pneg %p440
      $region30: #{_lambda_.1} parent=11 // pred_check_branch
        %490 = sbr.rel (%p488) target = $region32
      $region31: #{_lambda_.1} parent=11 // pred_region
        _
      $region32: #{_lambda_.1} parent=11 // pred_fallthru
        _
    $region12: #{_lambda_.1} parent=5 // pred_fallthru
      _
    %p491 = scmp.lt.s32.totalorder %s23, 2
    // Predicated region
    $region33: #{_lambda_.1} parent=5 // pred_check
      %p492 = pneg %p491
    $region34: #{_lambda_.1} parent=5 // pred_check_branch
      %494 = sbr.rel (%p492) target = $region36
    $region35: #{_lambda_.1} parent=5 // pred_region
      // Predicated region
      $region37: #{_lambda_.1} parent=35 // pred_check
        %p495 = pneg %p85
      $region38: #{_lambda_.1} parent=35 // pred_check_branch
        %497 = sbr.rel (%p495) target = $region40
      $region39: #{_lambda_.1} parent=35 // pred_region
        %p498 = scmp.lt.s32.totalorder %s23, 1
        %s499 = scalar_select %p498, %s23, 1
        %s500 = scalar_lea.vmem %s2, %s499
      $region40: #{_lambda_.1} parent=35 // pred_fallthru
        _
      // Predicated region
      $region41: #{_lambda_.1} parent=35 // pred_check
        %p501 = pneg %p111
      $region42: #{_lambda_.1} parent=35 // pred_check_branch
        %503 = sbr.rel (%p501) target = $region44
      $region43: #{_lambda_.1} parent=35 // pred_region
        %p504 = scmp.lt.s32.totalorder %s23, 1
        %s505 = scalar_select %p504, %s23, 1
        %s506 = scalar_lea.vmem %s3, %s505
      $region44: #{_lambda_.1} parent=35 // pred_fallthru
        _
      // Predicated region
      $region45: #{_lambda_.1} parent=35 // pred_check
        %p507 = pneg %p137
      $region46: #{_lambda_.1} parent=35 // pred_check_branch
        %509 = sbr.rel (%p507) target = $region48
      $region47: #{_lambda_.1} parent=35 // pred_region
        %p510 = scmp.lt.s32.totalorder %s23, 1
        %s511 = scalar_select %p510, %s23, 1
        %s512 = smul.addr %s511, 4
        %s513 = smul.addr %s512, 8
        %s514 = scalar_lea.vmem %s4, %s513
      $region48: #{_lambda_.1} parent=35 // pred_fallthru
        _
      // Predicated region
      $region49: #{_lambda_.1} parent=35 // pred_check
        %p515 = pneg %p163
      $region50: #{_lambda_.1} parent=35 // pred_check_branch
        %517 = sbr.rel (%p515) target = $region52
      $region51: #{_lambda_.1} parent=35 // pred_region
        %p518 = scmp.lt.s32.totalorder %s23, 1
        %s519 = scalar_select %p518, %s23, 1
        %s520 = scalar_lea.vmem %s5, %s519
      $region52: #{_lambda_.1} parent=35 // pred_fallthru
        _
      // Predicated region
      $region53: #{_lambda_.1} parent=35 // pred_check
        %p521 = pneg %p189
      $region54: #{_lambda_.1} parent=35 // pred_check_branch
        %523 = sbr.rel (%p521) target = $region56
      $region55: #{_lambda_.1} parent=35 // pred_region
        %p524 = scmp.lt.s32.totalorder %s23, 1
        %s525 = scalar_select %p524, %s23, 1
        %s526 = smul.addr %s525, 4
        %s527 = smul.addr %s526, 8
        %s528 = scalar_lea.vmem %s6, %s527
      $region56: #{_lambda_.1} parent=35 // pred_fallthru
        _
      // Predicated region
      $region57: #{_lambda_.1} parent=35 // pred_check
        %p529 = pneg %p215
      $region58: #{_lambda_.1} parent=35 // pred_check_branch
        %531 = sbr.rel (%p529) target = $region60
      $region59: #{_lambda_.1} parent=35 // pred_region
        %p532 = scmp.lt.s32.totalorder %s23, 1
        %s533 = scalar_select %p532, %s23, 1
        %s534 = scalar_lea.vmem %s7, %s533
      $region60: #{_lambda_.1} parent=35 // pred_fallthru
        _
      // Predicated region
      $region61: #{_lambda_.1} parent=35 // pred_check
        %p535 = pneg %p241
      $region62: #{_lambda_.1} parent=35 // pred_check_branch
        %537 = sbr.rel (%p535) target = $region64
      $region63: #{_lambda_.1} parent=35 // pred_region
        %p538 = scmp.lt.s32.totalorder %s23, 1
        %s539 = scalar_select %p538, %s23, 1
        %s540 = scalar_lea.vmem %s8, %s539
      $region64: #{_lambda_.1} parent=35 // pred_fallthru
        _
      // Predicated region
      $region65: #{_lambda_.1} parent=35 // pred_check
        %p541 = pneg %p267
      $region66: #{_lambda_.1} parent=35 // pred_check_branch
        %543 = sbr.rel (%p541) target = $region68
      $region67: #{_lambda_.1} parent=35 // pred_region
        %p544 = scmp.lt.s32.totalorder %s23, 1
        %s545 = scalar_select %p544, %s23, 1
        %s546 = scalar_lea.vmem %s9, %s545
      $region68: #{_lambda_.1} parent=35 // pred_fallthru
        _
      // Predicated region
      $region69: #{_lambda_.1} parent=35 // pred_check
        %p547 = pneg %p293
      $region70: #{_lambda_.1} parent=35 // pred_check_branch
        %549 = sbr.rel (%p547) target = $region72
      $region71: #{_lambda_.1} parent=35 // pred_region
        %p550 = scmp.lt.s32.totalorder %s23, 1
        %s551 = scalar_select %p550, %s23, 1
        %s552 = smul.addr %s551, 4
        %s553 = smul.addr %s552, 8
        %s554 = scalar_lea.vmem %s10, %s553
      $region72: #{_lambda_.1} parent=35 // pred_fallthru
        _
      // Predicated region
      $region73: #{_lambda_.1} parent=35 // pred_check
        %p555 = pneg %p319
      $region74: #{_lambda_.1} parent=35 // pred_check_branch
        %557 = sbr.rel (%p555) target = $region76
      $region75: #{_lambda_.1} parent=35 // pred_region
        %p558 = scmp.lt.s32.totalorder %s23, 1
        %s559 = scalar_select %p558, %s23, 1
        %s560 = scalar_lea.vmem %s11, %s559
      $region76: #{_lambda_.1} parent=35 // pred_fallthru
        _
      // Predicated region
      $region77: #{_lambda_.1} parent=35 // pred_check
        %p561 = pneg %p345
      $region78: #{_lambda_.1} parent=35 // pred_check_branch
        %563 = sbr.rel (%p561) target = $region80
      $region79: #{_lambda_.1} parent=35 // pred_region
        %p564 = scmp.lt.s32.totalorder %s23, 1
        %s565 = scalar_select %p564, %s23, 1
        %s566 = smul.addr %s565, 16
        %s567 = smul.addr %s566, 8
        %s568 = scalar_lea.vmem %s12, %s567
      $region80: #{_lambda_.1} parent=35 // pred_fallthru
        _
      // Predicated region
      $region81: #{_lambda_.1} parent=35 // pred_check
        %p569 = pneg %p371
      $region82: #{_lambda_.1} parent=35 // pred_check_branch
        %571 = sbr.rel (%p569) target = $region84
      $region83: #{_lambda_.1} parent=35 // pred_region
        %p572 = scmp.lt.s32.totalorder %s23, 1
        %s573 = scalar_select %p572, %s23, 1
        %s574 = scalar_lea.vmem %s13, %s573
      $region84: #{_lambda_.1} parent=35 // pred_fallthru
        _
    $region36: #{_lambda_.1} parent=5 // pred_fallthru
      _
    %p575 = scmp.le.s32.totalorder 1, %s23
    %p576 = scmp.lt.s32.totalorder %s23, 3
    %p577 = pnand %p575, %p576
    %p578 = pneg %p577
    // Predicated region
    $region85: #{_lambda_.1} parent=5 // pred_check
      _
    $region86: #{_lambda_.1} parent=5 // pred_check_branch
      %580 = sbr.rel (%p577) target = $region88
    $region87: #{_lambda_.1} parent=5 // pred_region
      %s581 = ssub.s32 %s23, 1
      %p582 = pneg %p44
      %p583 = pneg %p41
      %p584 = pneg %p65
      %p585 = pneg %p62
      %p586 = scmp.lt.s32.totalorder %s28, 1
      %s587 = scalar_select %p586, %s28, 1
      %s588 = scalar_lea.vmem %s2, %s587
      %p589 = pneg %p91
      %p590 = pneg %p88
      %p591 = scmp.lt.s32.totalorder %s28, 1
      %s592 = scalar_select %p591, %s28, 1
      %s593 = scalar_lea.vmem %s3, %s592
      %p594 = pneg %p117
      %p595 = pneg %p114
      %p596 = scmp.lt.s32.totalorder %s28, 1
      %s597 = scalar_select %p596, %s28, 1
      %s598 = smul.addr %s597, 4
      %s599 = smul.addr %s598, 8
      %s600 = scalar_lea.vmem %s4, %s599
      %p601 = pneg %p143
      %p602 = pneg %p140
      %p603 = scmp.lt.s32.totalorder %s28, 1
      %s604 = scalar_select %p603, %s28, 1
      %s605 = scalar_lea.vmem %s5, %s604
      %p606 = pneg %p169
      %p607 = pneg %p166
      %p608 = scmp.lt.s32.totalorder %s28, 1
      %s609 = scalar_select %p608, %s28, 1
      %s610 = smul.addr %s609, 4
      %s611 = smul.addr %s610, 8
      %s612 = scalar_lea.vmem %s6, %s611
      %p613 = pneg %p195
      %p614 = pneg %p192
      %p615 = scmp.lt.s32.totalorder %s28, 1
      %s616 = scalar_select %p615, %s28, 1
      %s617 = scalar_lea.vmem %s7, %s616
      %p618 = pneg %p221
      %p619 = pneg %p218
      %p620 = scmp.lt.s32.totalorder %s28, 1
      %s621 = scalar_select %p620, %s28, 1
      %s622 = scalar_lea.vmem %s8, %s621
      %p623 = pneg %p247
      %p624 = pneg %p244
      %p625 = scmp.lt.s32.totalorder %s28, 1
      %s626 = scalar_select %p625, %s28, 1
      %s627 = scalar_lea.vmem %s9, %s626
      %p628 = pneg %p273
      %p629 = pneg %p270
      %p630 = scmp.lt.s32.totalorder %s28, 1
      %s631 = scalar_select %p630, %s28, 1
      %s632 = smul.addr %s631, 4
      %s633 = smul.addr %s632, 8
      %s634 = scalar_lea.vmem %s10, %s633
      %p635 = pneg %p299
      %p636 = pneg %p296
      %p637 = scmp.lt.s32.totalorder %s28, 1
      %s638 = scalar_select %p637, %s28, 1
      %s639 = scalar_lea.vmem %s11, %s638
      %p640 = pneg %p325
      %p641 = pneg %p322
      %p642 = scmp.lt.s32.totalorder %s28, 1
      %s643 = scalar_select %p642, %s28, 1
      %s644 = smul.addr %s643, 16
      %s645 = smul.addr %s644, 8
      %s646 = scalar_lea.vmem %s12, %s645
      %p647 = pneg %p351
      %p648 = pneg %p348
      %p649 = scmp.lt.s32.totalorder %s28, 1
      %s650 = scalar_select %p649, %s28, 1
      %s651 = scalar_lea.vmem %s13, %s650
      %p652 = pneg %p377
      %p653 = pneg %p374
      %p654 = pneg %p398
      %p655 = pneg %p395
      %p656 = pneg %p419
      %p657 = pneg %p416
      %p658 = pneg %p440
      %p659 = pneg %p437
      %p660 = pneg %p461
      %p661 = pneg %p458
      %p662 = scmp.lt.s32.totalorder %s28, 1
      %s663 = scalar_select %p662, %s28, 1
      %s664 = scalar_lea.vmem %s2, %s663
      %p665 = scmp.lt.s32.totalorder %s28, 1
      %s666 = scalar_select %p665, %s28, 1
      %s667 = scalar_lea.vmem %s3, %s666
      %p668 = scmp.lt.s32.totalorder %s28, 1
      %s669 = scalar_select %p668, %s28, 1
      %s670 = smul.addr %s669, 4
      %s671 = smul.addr %s670, 8
      %s672 = scalar_lea.vmem %s4, %s671
      %p673 = scmp.lt.s32.totalorder %s28, 1
      %s674 = scalar_select %p673, %s28, 1
      %s675 = scalar_lea.vmem %s5, %s674
      %p676 = scmp.lt.s32.totalorder %s28, 1
      %s677 = scalar_select %p676, %s28, 1
      %s678 = smul.addr %s677, 4
      %s679 = smul.addr %s678, 8
      %s680 = scalar_lea.vmem %s6, %s679
      %p681 = scmp.lt.s32.totalorder %s28, 1
      %s682 = scalar_select %p681, %s28, 1
      %s683 = scalar_lea.vmem %s7, %s682
      %p684 = scmp.lt.s32.totalorder %s28, 1
      %s685 = scalar_select %p684, %s28, 1
      %s686 = scalar_lea.vmem %s8, %s685
      %p687 = scmp.lt.s32.totalorder %s28, 1
      %s688 = scalar_select %p687, %s28, 1
      %s689 = scalar_lea.vmem %s9, %s688
      %p690 = scmp.lt.s32.totalorder %s28, 1
      %s691 = scalar_select %p690, %s28, 1
      %s692 = smul.addr %s691, 4
      %s693 = smul.addr %s692, 8
      %s694 = scalar_lea.vmem %s10, %s693
      %p695 = scmp.lt.s32.totalorder %s28, 1
      %s696 = scalar_select %p695, %s28, 1
      %s697 = scalar_lea.vmem %s11, %s696
      %p698 = scmp.lt.s32.totalorder %s28, 1
      %s699 = scalar_select %p698, %s28, 1
      %s700 = smul.addr %s699, 16
      %s701 = smul.addr %s700, 8
      %s702 = scalar_lea.vmem %s12, %s701
      %p703 = scmp.lt.s32.totalorder %s28, 1
      %s704 = scalar_select %p703, %s28, 1
      %s705 = scalar_lea.vmem %s13, %s704
      %p706 = scmp.eq.s32.totalorder %s28, 0
      // Predicated region
      $region89: #{_lambda_.1} parent=87 // pred_check
        %p707 = pneg %p706
      $region90: #{_lambda_.1} parent=87 // pred_check_branch
        %709 = sbr.rel (%p707) target = $region92
      $region91: #{_lambda_.1} parent=87 // pred_region
        %v710 = vld [vmem:[%s0] sm:$0xff]
        %v711 = vld [vmem:[%s0 + $0x8] sm:$0xff]
        %vm712 = vcmask 261120
        %713 = vst.msk [vmem:[#allocation2] sm:$0xff] %vm712, %v710
        %714 = vst.msk [vmem:[#allocation2 + $0x8] sm:$0xff] %vm712, %v711
      $region92: #{_lambda_.1} parent=87 // pred_fallthru
        _
      %v715 = vld [vmem:[#allocation2] sm:$0xff]
      %v716 = vld [vmem:[#allocation2 + $0x8] sm:$0xff]
      %v717 = vld [vmem:[%s1] sm:$0xff]
      %v718 = vld [vmem:[%s1 + $0x8] sm:$0xff]
      %v719 = vld [vmem:[%s664] sm:$0x1]
      %v720 = vld [vmem:[%s667] sm:$0x1]
      %vm721 = vcmask 261120
      %v722 = vsel %vm721, %v715, 0.0
      %723 = vadd.xlane.f32.xlu0 %v722
      %v724 = vpop.xlane.xlu0 %723
      %v725 = vsel %vm721, %v716, 0.0
      %726 = vadd.xlane.f32.xlu0 %v725
      %v727 = vpop.xlane.xlu0 %726
      %v728 = vrcp.pop 32.0
      %v729 = vmul.f32 %v724, %v728
      %v730 = vmul.f32 %v727, %v728
      %v731 = vsub.f32 %v715, %v729
      %v732 = vsub.f32 %v716, %v730
      %v733 = vmul.f32 %v731, %v731
      %v734 = vmul.f32 %v732, %v732
      %v735 = vsel %vm721, %v733, 0.0
      %736 = vadd.xlane.f32.xlu0 %v735
      %v737 = vpop.xlane.xlu0 %736
      %v738 = vsel %vm721, %v734, 0.0
      %739 = vadd.xlane.f32.xlu0 %v738
      %v740 = vpop.xlane.xlu0 %739
      %v741 = vmul.f32 %v737, %v728
      %v742 = vmul.f32 %v740, %v728
      %v743 = vadd.f32 %v741, 1e-05
      %v744 = vadd.f32 %v742, 1e-05
      %v745 = vrsqrt.pop %v743
      %v746 = vrsqrt.pop %v744
      %v747 = vmul.f32 %v731, %v745
      %v748 = vmul.f32 %v732, %v746
      %v750 = vlaneseq
      %v751 = vshrl.u32 %v750, 7
      %v752 = vsub.s32 0, %v751
      %v753 = vrot.slane %v719, %v752
      %v755 = vmul.f32 %v747, %v753
      %v756 = vmul.f32 %v748, %v753
      %v758 = vlaneseq
      %v759 = vshrl.u32 %v758, 7
      %v760 = vsub.s32 0, %v759
      %v761 = vrot.slane %v720, %v760
      %v763 = vadd.f32 %v755, %v761
      %v764 = vadd.f32 %v756, %v761
      %v765 = vld [vmem:[%s672] sm:$0xff]
      %v766 = vld [vmem:[%s672 + $0x8] sm:$0xff]
      %v767 = vld [vmem:[%s672 + $0x10] sm:$0xff]
      %v768 = vld [vmem:[%s672 + $0x18] sm:$0xff]
      %v769 = vld [vmem:[%s675] sm:$0x1]
      %v771 = vlaneseq
      %v772 = vshrl.u32 %v771, 7
      %v773 = vsub.s32 0, %v772
      %v774 = vrot.slane %v769, %v773
      %v777 = vsel %vm721, %v763, 0
      %v780 = vsel %vm721, %v764, 0
      %782 = vmatprep.subr.mxu0 0.0
      %783 = vmatpush1.msra.mxu0 %v765
      %784 = vmatprep.subr.mxu0 0.0
      %785 = vmatpush1.msra.mxu0 %v766
      %786 = vmatprep.subr.mxu0 0.0
      %787 = vmatpush1.msra.mxu0 %v767
      %788 = vmatprep.subr.mxu0 0.0
      %789 = vmatpush1.msra.mxu0 %v768
      %790 = vmatprep.subr.mxu0 0.0
      %791 = vmatpush1.msra.mxu0 0.0
      %792 = vmatprep.subr.mxu0 0.0
      %793 = vmatpush1.msra.mxu0 0.0
      %794 = vmatprep.subr.mxu0 0.0
      %795 = vmatpush1.msra.mxu0 0.0
      %796 = vmatprep.subr.mxu0 0.0
      %797 = vmatpush1.msra.mxu0 0.0
      %798 = vmatprep.subr.mxu0 0.0
      %799 = vmatpush1.msra.mxu0 0.0
      %800 = vmatprep.subr.mxu0 0.0
      %801 = vmatpush1.msra.mxu0 0.0
      %802 = vmatprep.subr.mxu0 0.0
      %803 = vmatpush1.msra.mxu0 0.0
      %804 = vmatprep.subr.mxu0 0.0
      %805 = vmatpush1.msra.mxu0 0.0
      %806 = vmatprep.subr.mxu0 0.0
      %807 = vmatpush1.msra.mxu0 0.0
      %808 = vmatprep.subr.mxu0 0.0
      %809 = vmatpush1.msra.mxu0 0.0
      %810 = vmatprep.subr.mxu0 0.0
      %811 = vmatpush1.msra.mxu0 0.0
      %812 = vmatprep.subr.mxu0 0.0
      %813 = vmatpush1.msra.mxu0 0.0
      %814 = vmatprep.subr.mxu0 0.0
      %815 = vmatpush1.msra.mxu0 0.0
      %816 = vmatprep.subr.mxu0 0.0
      %817 = vmatpush1.msra.mxu0 0.0
      %818 = vmatprep.subr.mxu0 0.0
      %819 = vmatpush1.msra.mxu0 0.0
      %820 = vmatprep.subr.mxu0 0.0
      %821 = vmatpush1.msra.mxu0 0.0
      %822 = vmatprep.subr.mxu0 0.0
      %823 = vmatpush1.msra.mxu0 0.0
      %824 = vmatprep.subr.mxu0 0.0
      %825 = vmatpush1.msra.mxu0 0.0
      %826 = vmatprep.subr.mxu0 0.0
      %827 = vmatpush1.msra.mxu0 0.0
      %828 = vmatprep.subr.mxu0 0.0
      %829 = vmatpush1.msra.mxu0 0.0
      %830 = vmatprep.subr.mxu0 0.0
      %831 = vmatpush1.msra.mxu0 0.0
      %832 = vmatprep.subr.mxu0 0.0
      %833 = vmatpush1.msra.mxu0 0.0
      %834 = vmatprep.subr.mxu0 0.0
      %835 = vmatpush1.msra.mxu0 0.0
      %836 = vmatprep.subr.mxu0 0.0
      %837 = vmatpush1.msra.mxu0 0.0
      %838 = vmatprep.subr.mxu0 0.0
      %839 = vmatpush1.msra.mxu0 0.0
      %840 = vmatprep.subr.mxu0 0.0
      %841 = vmatpush1.msra.mxu0 0.0
      %842 = vmatprep.subr.mxu0 0.0
      %843 = vmatpush1.msra.mxu0 0.0
      %844 = vmatprep.subr.mxu0 0.0
      %845 = vmatpush1.msra.mxu0 0.0
      %846 = vmatprep.mubr.f32.mxu0 0.0
      %847 = vmatmul.mubr.f32.gmra.mrb[0].mxu0 %v777
      %v848 = vpop.f32.mrb[0].mxu0
      %v849 = vadd.f32 %v774, %v848
      %v850 = vpop.f32.mrb[0].mxu0
      %851 = vmatprep.mubr.f32.mxu0 0.0
      %852 = vmatmul.mubr.f32.gmra.mrb[0].mxu0 %v780
      %v853 = vpop.f32.mrb[0].mxu0
      %v854 = vadd.f32 %v774, %v853
      %v855 = vpop.f32.mrb[0].mxu0
      %856 = vdwg.mxu0
      %v857 = vld [vmem:[%s680] sm:$0xff]
      %v858 = vld [vmem:[%s680 + $0x8] sm:$0xff]
      %v859 = vld [vmem:[%s680 + $0x10] sm:$0xff]
      %v860 = vld [vmem:[%s680 + $0x18] sm:$0xff]
      %863 = vrot.lane.b32.xlu0 %v849, 96
      %v864 = vpop.permute.xlu0 %863
      %865 = vrot.lane.b32.xlu0 %v854, 96
      %v866 = vpop.permute.xlu0 %865
      %vm867 = vcmask 64512
      %v868 = vsel %vm867, %v849, 0
      %v870 = vsel %vm867, %v854, 0
      %v872 = vsel %vm867, %v864, 0
      %v874 = vsel %vm867, %v866, 0
      %876 = vmatprep.subr.mxu0 0.0
      %877 = vmatpush1.xpose.msra.mxu0 %v872
      %878 = vmatprep.subr.mxu0 0.0
      %879 = vmatpush1.xpose.msra.mxu0 %v874
      %880 = vmatprep.subr.mxu0 0.0
      %881 = vmatpush1.xpose.msra.mxu0 0.0
      %882 = vmatprep.subr.mxu0 0.0
      %883 = vmatpush1.xpose.msra.mxu0 0.0
      %884 = vmatprep.subr.mxu0 0.0
      %885 = vmatpush1.xpose.msra.mxu0 0.0
      %886 = vmatprep.subr.mxu0 0.0
      %887 = vmatpush1.xpose.msra.mxu0 0.0
      %888 = vmatprep.subr.mxu0 0.0
      %889 = vmatpush1.xpose.msra.mxu0 0.0
      %890 = vmatprep.subr.mxu0 0.0
      %891 = vmatpush1.xpose.msra.mxu0 0.0
      %892 = vmatprep.subr.mxu0 0.0
      %893 = vmatpush1.xpose.msra.mxu0 0.0
      %894 = vmatprep.subr.mxu0 0.0
      %895 = vmatpush1.xpose.msra.mxu0 0.0
      %896 = vmatprep.subr.mxu0 0.0
      %897 = vmatpush1.xpose.msra.mxu0 0.0
      %898 = vmatprep.subr.mxu0 0.0
      %899 = vmatpush1.xpose.msra.mxu0 0.0
      %900 = vmatprep.subr.mxu0 0.0
      %901 = vmatpush1.xpose.msra.mxu0 0.0
      %902 = vmatprep.subr.mxu0 0.0
      %903 = vmatpush1.xpose.msra.mxu0 0.0
      %904 = vmatprep.subr.mxu0 0.0
      %905 = vmatpush1.xpose.msra.mxu0 0.0
      %906 = vmatprep.subr.mxu0 0.0
      %907 = vmatpush1.xpose.msra.mxu0 0.0
      %908 = vmatprep.subr.mxu0 0.0
      %909 = vmatpush1.xpose.msra.mxu0 0.0
      %910 = vmatprep.subr.mxu0 0.0
      %911 = vmatpush1.xpose.msra.mxu0 0.0
      %912 = vmatprep.subr.mxu0 0.0
      %913 = vmatpush1.xpose.msra.mxu0 0.0
      %914 = vmatprep.subr.mxu0 0.0
      %915 = vmatpush1.xpose.msra.mxu0 0.0
      %916 = vmatprep.subr.mxu0 0.0
      %917 = vmatpush1.xpose.msra.mxu0 0.0
      %918 = vmatprep.subr.mxu0 0.0
      %919 = vmatpush1.xpose.msra.mxu0 0.0
      %920 = vmatprep.subr.mxu0 0.0
      %921 = vmatpush1.xpose.msra.mxu0 0.0
      %922 = vmatprep.subr.mxu0 0.0
      %923 = vmatpush1.xpose.msra.mxu0 0.0
      %924 = vmatprep.subr.mxu0 0.0
      %925 = vmatpush1.xpose.msra.mxu0 0.0
      %926 = vmatprep.subr.mxu0 0.0
      %927 = vmatpush1.xpose.msra.mxu0 0.0
      %928 = vmatprep.subr.mxu0 0.0
      %929 = vmatpush1.xpose.msra.mxu0 0.0
      %930 = vmatprep.subr.mxu0 0.0
      %931 = vmatpush1.xpose.msra.mxu0 0.0
      %932 = vmatprep.subr.mxu0 0.0
      %933 = vmatpush1.xpose.msra.mxu0 0.0
      %934 = vmatprep.subr.mxu0 0.0
      %935 = vmatpush1.xpose.msra.mxu0 0.0
      %936 = vmatprep.subr.mxu0 0.0
      %937 = vmatpush1.xpose.msra.mxu0 0.0
      %938 = vmatprep.subr.mxu0 0.0
      %939 = vmatpush1.xpose.msra.mxu0 0.0
      %940 = vmatprep.mubr.f32.mxu0 0.0
      %941 = vmatmul.mubr.f32.gmra.mrb[0].mxu0 %v868
      %v942 = vpop.f32.mrb[0].mxu0
      %v943 = vadd.f32 0.0, %v942
      %v944 = vpop.f32.mrb[0].mxu0
      %945 = vmatprep.mubr.f32.mxu0 0.0
      %946 = vmatmul.mubr.f32.gmra.mrb[0].mxu0 %v870
      %v947 = vpop.f32.mrb[0].mxu0
      %v948 = vadd.f32 0.0, %v947
      %v949 = vpop.f32.mrb[0].mxu0
      %950 = vdwg.mxu0
      %v951 = vmul.f32 %v943, 0.35355338
      %v952 = vmul.f32 %v948, 0.35355338
      %v953 = vadd.f32 %v951, %v717
      %v954 = vadd.f32 %v952, %v718
      %vm955 = vcmask 130048
      %v956 = vsel %vm955, %v953, -inf
      %957 = vmax.xlane.f32.xlu0 %v956
      %v958 = vpop.xlane.xlu0 %957
      %v959 = vsel %vm955, %v954, -inf
      %960 = vmax.xlane.f32.xlu0 %v959
      %v961 = vpop.xlane.xlu0 %960
      %v962 = vsub.f32 %v953, %v958
      %v963 = vsub.f32 %v954, %v961
      %v964 = vmul.f32 %v962, 1.442695
      %v965 = vpow.pop %v964
      %v966 = vmul.f32 %v963, 1.442695
      %v967 = vpow.pop %v966
      %v968 = vsel %vm955, %v965, 0.0
      %969 = vadd.xlane.f32.xlu0 %v968
      %v970 = vpop.xlane.xlu0 %969
      %v971 = vsel %vm955, %v967, 0.0
      %972 = vadd.xlane.f32.xlu0 %v971
      %v973 = vpop.xlane.xlu0 %972
      %v974 = vrcp.pop %v970
      %v975 = vrcp.pop %v973
      %v976 = vmul.f32 %v965, %v974
      %v977 = vmul.f32 %v967, %v975
      %978 = vrot.lane.b32.xlu0 %v849, 64
      %v979 = vpop.permute.xlu0 %978
      %980 = vrot.lane.b32.xlu0 %v854, 64
      %v981 = vpop.permute.xlu0 %980
      %v985 = vsel %vm955, %v976, 0
      %v988 = vsel %vm955, %v977, 0
      %990 = vmatprep.subr.mxu0 0.0
      %991 = vmatpush1.msra.mxu0 %v979
      %992 = vmatprep.subr.mxu0 0.0
      %993 = vmatpush1.msra.mxu0 %v981
      %994 = vmatprep.subr.mxu0 0.0
      %995 = vmatpush1.msra.mxu0 0.0
      %996 = vmatprep.subr.mxu0 0.0
      %997 = vmatpush1.msra.mxu0 0.0
      %998 = vmatprep.subr.mxu0 0.0
      %999 = vmatpush1.msra.mxu0 0.0
      %1000 = vmatprep.subr.mxu0 0.0
      %1001 = vmatpush1.msra.mxu0 0.0
      %1002 = vmatprep.subr.mxu0 0.0
      %1003 = vmatpush1.msra.mxu0 0.0
      %1004 = vmatprep.subr.mxu0 0.0
      %1005 = vmatpush1.msra.mxu0 0.0
      %1006 = vmatprep.subr.mxu0 0.0
      %1007 = vmatpush1.msra.mxu0 0.0
      %1008 = vmatprep.subr.mxu0 0.0
      %1009 = vmatpush1.msra.mxu0 0.0
      %1010 = vmatprep.subr.mxu0 0.0
      %1011 = vmatpush1.msra.mxu0 0.0
      %1012 = vmatprep.subr.mxu0 0.0
      %1013 = vmatpush1.msra.mxu0 0.0
      %1014 = vmatprep.subr.mxu0 0.0
      %1015 = vmatpush1.msra.mxu0 0.0
      %1016 = vmatprep.subr.mxu0 0.0
      %1017 = vmatpush1.msra.mxu0 0.0
      %1018 = vmatprep.subr.mxu0 0.0
      %1019 = vmatpush1.msra.mxu0 0.0
      %1020 = vmatprep.subr.mxu0 0.0
      %1021 = vmatpush1.msra.mxu0 0.0
      %1022 = vmatprep.subr.mxu0 0.0
      %1023 = vmatpush1.msra.mxu0 0.0
      %1024 = vmatprep.subr.mxu0 0.0
      %1025 = vmatpush1.msra.mxu0 0.0
      %1026 = vmatprep.subr.mxu0 0.0
      %1027 = vmatpush1.msra.mxu0 0.0
      %1028 = vmatprep.subr.mxu0 0.0
      %1029 = vmatpush1.msra.mxu0 0.0
      %1030 = vmatprep.subr.mxu0 0.0
      %1031 = vmatpush1.msra.mxu0 0.0
      %1032 = vmatprep.subr.mxu0 0.0
      %1033 = vmatpush1.msra.mxu0 0.0
      %1034 = vmatprep.subr.mxu0 0.0
      %1035 = vmatpush1.msra.mxu0 0.0
      %1036 = vmatprep.subr.mxu0 0.0
      %1037 = vmatpush1.msra.mxu0 0.0
      %1038 = vmatprep.subr.mxu0 0.0
      %1039 = vmatpush1.msra.mxu0 0.0
      %1040 = vmatprep.subr.mxu0 0.0
      %1041 = vmatpush1.msra.mxu0 0.0
      %1042 = vmatprep.subr.mxu0 0.0
      %1043 = vmatpush1.msra.mxu0 0.0
      %1044 = vmatprep.subr.mxu0 0.0
      %1045 = vmatpush1.msra.mxu0 0.0
      %1046 = vmatprep.subr.mxu0 0.0
      %1047 = vmatpush1.msra.mxu0 0.0
      %1048 = vmatprep.subr.mxu0 0.0
      %1049 = vmatpush1.msra.mxu0 0.0
      %1050 = vmatprep.subr.mxu0 0.0
      %1051 = vmatpush1.msra.mxu0 0.0
      %1052 = vmatprep.subr.mxu0 0.0
      %1053 = vmatpush1.msra.mxu0 0.0
      %1054 = vmatprep.mubr.f32.mxu0 0.0
      %1055 = vmatmul.mubr.f32.gmra.mrb[0].mxu0 %v985
      %v1056 = vpop.f32.mrb[0].mxu0
      %v1057 = vadd.f32 0.0, %v1056
      %v1058 = vpop.f32.mrb[0].mxu0
      %1059 = vmatprep.mubr.f32.mxu0 0.0
      %1060 = vmatmul.mubr.f32.gmra.mrb[0].mxu0 %v988
      %v1061 = vpop.f32.mrb[0].mxu0
      %v1062 = vadd.f32 0.0, %v1061
      %v1063 = vpop.f32.mrb[0].mxu0
      %1064 = vdwg.mxu0
      %1065 = vrot.lane.b32.xlu0 %v849, 120
      %v1066 = vpop.permute.xlu0 %1065
      %1067 = vrot.lane.b32.xlu0 %v854, 120
      %v1068 = vpop.permute.xlu0 %1067
      %1069 = vrot.lane.b32.xlu0 %v849, 88
      %v1070 = vpop.permute.xlu0 %1069
      %1071 = vrot.lane.b32.xlu0 %v854, 88
      %v1072 = vpop.permute.xlu0 %1071
      %v1073 = vsel %vm867, %v1066, 0
      %v1075 = vsel %vm867, %v1068, 0
      %v1077 = vsel %vm867, %v1070, 0
      %v1079 = vsel %vm867, %v1072, 0
      %1081 = vmatprep.subr.mxu0 0.0
      %1082 = vmatpush1.xpose.msra.mxu0 %v1077
      %1083 = vmatprep.subr.mxu0 0.0
      %1084 = vmatpush1.xpose.msra.mxu0 %v1079
      %1085 = vmatprep.subr.mxu0 0.0
      %1086 = vmatpush1.xpose.msra.mxu0 0.0
      %1087 = vmatprep.subr.mxu0 0.0
      %1088 = vmatpush1.xpose.msra.mxu0 0.0
      %1089 = vmatprep.subr.mxu0 0.0
      %1090 = vmatpush1.xpose.msra.mxu0 0.0
      %1091 = vmatprep.subr.mxu0 0.0
      %1092 = vmatpush1.xpose.msra.mxu0 0.0
      %1093 = vmatprep.subr.mxu0 0.0
      %1094 = vmatpush1.xpose.msra.mxu0 0.0
      %1095 = vmatprep.subr.mxu0 0.0
      %1096 = vmatpush1.xpose.msra.mxu0 0.0
      %1097 = vmatprep.subr.mxu0 0.0
      %1098 = vmatpush1.xpose.msra.mxu0 0.0
      %1099 = vmatprep.subr.mxu0 0.0
      %1100 = vmatpush1.xpose.msra.mxu0 0.0
      %1101 = vmatprep.subr.mxu0 0.0
      %1102 = vmatpush1.xpose.msra.mxu0 0.0
      %1103 = vmatprep.subr.mxu0 0.0
      %1104 = vmatpush1.xpose.msra.mxu0 0.0
      %1105 = vmatprep.subr.mxu0 0.0
      %1106 = vmatpush1.xpose.msra.mxu0 0.0
      %1107 = vmatprep.subr.mxu0 0.0
      %1108 = vmatpush1.xpose.msra.mxu0 0.0
      %1109 = vmatprep.subr.mxu0 0.0
      %1110 = vmatpush1.xpose.msra.mxu0 0.0
      %1111 = vmatprep.subr.mxu0 0.0
      %1112 = vmatpush1.xpose.msra.mxu0 0.0
      %1113 = vmatprep.subr.mxu0 0.0
      %1114 = vmatpush1.xpose.msra.mxu0 0.0
      %1115 = vmatprep.subr.mxu0 0.0
      %1116 = vmatpush1.xpose.msra.mxu0 0.0
      %1117 = vmatprep.subr.mxu0 0.0
      %1118 = vmatpush1.xpose.msra.mxu0 0.0
      %1119 = vmatprep.subr.mxu0 0.0
      %1120 = vmatpush1.xpose.msra.mxu0 0.0
      %1121 = vmatprep.subr.mxu0 0.0
      %1122 = vmatpush1.xpose.msra.mxu0 0.0
      %1123 = vmatprep.subr.mxu0 0.0
      %1124 = vmatpush1.xpose.msra.mxu0 0.0
      %1125 = vmatprep.subr.mxu0 0.0
      %1126 = vmatpush1.xpose.msra.mxu0 0.0
      %1127 = vmatprep.subr.mxu0 0.0
      %1128 = vmatpush1.xpose.msra.mxu0 0.0
      %1129 = vmatprep.subr.mxu0 0.0
      %1130 = vmatpush1.xpose.msra.mxu0 0.0
      %1131 = vmatprep.subr.mxu0 0.0
      %1132 = vmatpush1.xpose.msra.mxu0 0.0
      %1133 = vmatprep.subr.mxu0 0.0
      %1134 = vmatpush1.xpose.msra.mxu0 0.0
      %1135 = vmatprep.subr.mxu0 0.0
      %1136 = vmatpush1.xpose.msra.mxu0 0.0
      %1137 = vmatprep.subr.mxu0 0.0
      %1138 = vmatpush1.xpose.msra.mxu0 0.0
      %1139 = vmatprep.subr.mxu0 0.0
      %1140 = vmatpush1.xpose.msra.mxu0 0.0
      %1141 = vmatprep.subr.mxu0 0.0
      %1142 = vmatpush1.xpose.msra.mxu0 0.0
      %1143 = vmatprep.subr.mxu0 0.0
      %1144 = vmatpush1.xpose.msra.mxu0 0.0
      %1145 = vmatprep.mubr.f32.mxu0 0.0
      %1146 = vmatmul.mubr.f32.gmra.mrb[0].mxu0 %v1073
      %v1147 = vpop.f32.mrb[0].mxu0
      %v1148 = vadd.f32 0.0, %v1147
      %v1149 = vpop.f32.mrb[0].mxu0
      %1150 = vmatprep.mubr.f32.mxu0 0.0
      %1151 = vmatmul.mubr.f32.gmra.mrb[0].mxu0 %v1075
      %v1152 = vpop.f32.mrb[0].mxu0
      %v1153 = vadd.f32 0.0, %v1152
      %v1154 = vpop.f32.mrb[0].mxu0
      %1155 = vdwg.mxu0
      %v1156 = vmul.f32 %v1148, 0.35355338
      %v1157 = vmul.f32 %v1153, 0.35355338
      %v1158 = vadd.f32 %v1156, %v717
      %v1159 = vadd.f32 %v1157, %v718
      %v1160 = vsel %vm955, %v1158, -inf
      %1161 = vmax.xlane.f32.xlu0 %v1160
      %v1162 = vpop.xlane.xlu0 %1161
      %v1163 = vsel %vm955, %v1159, -inf
      %1164 = vmax.xlane.f32.xlu0 %v1163
      %v1165 = vpop.xlane.xlu0 %1164
      %v1166 = vsub.f32 %v1158, %v1162
      %v1167 = vsub.f32 %v1159, %v1165
      %v1168 = vmul.f32 %v1166, 1.442695
      %v1169 = vpow.pop %v1168
      %v1170 = vmul.f32 %v1167, 1.442695
      %v1171 = vpow.pop %v1170
      %v1172 = vsel %vm955, %v1169, 0.0
      %1173 = vadd.xlane.f32.xlu0 %v1172
      %v1174 = vpop.xlane.xlu0 %1173
      %v1175 = vsel %vm955, %v1171, 0.0
      %1176 = vadd.xlane.f32.xlu0 %v1175
      %v1177 = vpop.xlane.xlu0 %1176
      %v1178 = vrcp.pop %v1174
      %v1179 = vrcp.pop %v1177
      %v1180 = vmul.f32 %v1169, %v1178
      %v1181 = vmul.f32 %v1171, %v1179
      %1182 = vrot.lane.b32.xlu0 %v849, 56
      %v1183 = vpop.permute.xlu0 %1182
      %1184 = vrot.lane.b32.xlu0 %v854, 56
      %v1185 = vpop.permute.xlu0 %1184
      %v1189 = vsel %vm955, %v1180, 0
      %v1192 = vsel %vm955, %v1181, 0
      %1194 = vmatprep.subr.mxu0 0.0
      %1195 = vmatpush1.msra.mxu0 %v1183
      %1196 = vmatprep.subr.mxu0 0.0
      %1197 = vmatpush1.msra.mxu0 %v1185
      %1198 = vmatprep.subr.mxu0 0.0
      %1199 = vmatpush1.msra.mxu0 0.0
      %1200 = vmatprep.subr.mxu0 0.0
      %1201 = vmatpush1.msra.mxu0 0.0
      %1202 = vmatprep.subr.mxu0 0.0
      %1203 = vmatpush1.msra.mxu0 0.0
      %1204 = vmatprep.subr.mxu0 0.0
      %1205 = vmatpush1.msra.mxu0 0.0
      %1206 = vmatprep.subr.mxu0 0.0
      %1207 = vmatpush1.msra.mxu0 0.0
      %1208 = vmatprep.subr.mxu0 0.0
      %1209 = vmatpush1.msra.mxu0 0.0
      %1210 = vmatprep.subr.mxu0 0.0
      %1211 = vmatpush1.msra.mxu0 0.0
      %1212 = vmatprep.subr.mxu0 0.0
      %1213 = vmatpush1.msra.mxu0 0.0
      %1214 = vmatprep.subr.mxu0 0.0
      %1215 = vmatpush1.msra.mxu0 0.0
      %1216 = vmatprep.subr.mxu0 0.0
      %1217 = vmatpush1.msra.mxu0 0.0
      %1218 = vmatprep.subr.mxu0 0.0
      %1219 = vmatpush1.msra.mxu0 0.0
      %1220 = vmatprep.subr.mxu0 0.0
      %1221 = vmatpush1.msra.mxu0 0.0
      %1222 = vmatprep.subr.mxu0 0.0
      %1223 = vmatpush1.msra.mxu0 0.0
      %1224 = vmatprep.subr.mxu0 0.0
      %1225 = vmatpush1.msra.mxu0 0.0
      %1226 = vmatprep.subr.mxu0 0.0
      %1227 = vmatpush1.msra.mxu0 0.0
      %1228 = vmatprep.subr.mxu0 0.0
      %1229 = vmatpush1.msra.mxu0 0.0
      %1230 = vmatprep.subr.mxu0 0.0
      %1231 = vmatpush1.msra.mxu0 0.0
      %1232 = vmatprep.subr.mxu0 0.0
      %1233 = vmatpush1.msra.mxu0 0.0
      %1234 = vmatprep.subr.mxu0 0.0
      %1235 = vmatpush1.msra.mxu0 0.0
      %1236 = vmatprep.subr.mxu0 0.0
      %1237 = vmatpush1.msra.mxu0 0.0
      %1238 = vmatprep.subr.mxu0 0.0
      %1239 = vmatpush1.msra.mxu0 0.0
      %1240 = vmatprep.subr.mxu0 0.0
      %1241 = vmatpush1.msra.mxu0 0.0
      %1242 = vmatprep.subr.mxu0 0.0
      %1243 = vmatpush1.msra.mxu0 0.0
      %1244 = vmatprep.subr.mxu0 0.0
      %1245 = vmatpush1.msra.mxu0 0.0
      %1246 = vmatprep.subr.mxu0 0.0
      %1247 = vmatpush1.msra.mxu0 0.0
      %1248 = vmatprep.subr.mxu0 0.0
      %1249 = vmatpush1.msra.mxu0 0.0
      %1250 = vmatprep.subr.mxu0 0.0
      %1251 = vmatpush1.msra.mxu0 0.0
      %1252 = vmatprep.subr.mxu0 0.0
      %1253 = vmatpush1.msra.mxu0 0.0
      %1254 = vmatprep.subr.mxu0 0.0
      %1255 = vmatpush1.msra.mxu0 0.0
      %1256 = vmatprep.subr.mxu0 0.0
      %1257 = vmatpush1.msra.mxu0 0.0
      %1258 = vmatprep.mubr.f32.mxu0 0.0
      %1259 = vmatmul.mubr.f32.gmra.mrb[0].mxu0 %v1189
      %v1260 = vpop.f32.mrb[0].mxu0
      %v1261 = vadd.f32 0.0, %v1260
      %v1262 = vpop.f32.mrb[0].mxu0
      %1263 = vmatprep.mubr.f32.mxu0 0.0
      %1264 = vmatmul.mubr.f32.gmra.mrb[0].mxu0 %v1192
      %v1265 = vpop.f32.mrb[0].mxu0
      %v1266 = vadd.f32 0.0, %v1265
      %v1267 = vpop.f32.mrb[0].mxu0
      %1268 = vdwg.mxu0
      %v1270 = vsel %vm867, %v1261, 0
      %v1273 = vsel %vm867, %v1266, 0
      %1275 = vmatprep.subr.mxu0 0.0
      %1276 = vmatpush1.msra.mxu0 %v858
      %1277 = vmatprep.subr.mxu0 0.0
      %1278 = vmatpush1.msra.mxu0 0.0
      %1279 = vmatprep.subr.mxu0 0.0
      %1280 = vmatpush1.msra.mxu0 0.0
      %1281 = vmatprep.subr.mxu0 0.0
      %1282 = vmatpush1.msra.mxu0 0.0
      %1283 = vmatprep.subr.mxu0 0.0
      %1284 = vmatpush1.msra.mxu0 0.0
      %1285 = vmatprep.subr.mxu0 0.0
      %1286 = vmatpush1.msra.mxu0 0.0
      %1287 = vmatprep.subr.mxu0 0.0
      %1288 = vmatpush1.msra.mxu0 0.0
      %1289 = vmatprep.subr.mxu0 0.0
      %1290 = vmatpush1.msra.mxu0 0.0
      %1291 = vmatprep.subr.mxu0 0.0
      %1292 = vmatpush1.msra.mxu0 0.0
      %1293 = vmatprep.subr.mxu0 0.0
      %1294 = vmatpush1.msra.mxu0 0.0
      %1295 = vmatprep.subr.mxu0 0.0
      %1296 = vmatpush1.msra.mxu0 0.0
      %1297 = vmatprep.subr.mxu0 0.0
      %1298 = vmatpush1.msra.mxu0 0.0
      %1299 = vmatprep.subr.mxu0 0.0
      %1300 = vmatpush1.msra.mxu0 0.0
      %1301 = vmatprep.subr.mxu0 0.0
      %1302 = vmatpush1.msra.mxu0 0.0
      %1303 = vmatprep.subr.mxu0 0.0
      %1304 = vmatpush1.msra.mxu0 0.0
      %1305 = vmatprep.subr.mxu0 0.0
      %1306 = vmatpush1.msra.mxu0 0.0
      %1307 = vmatprep.subr.mxu0 0.0
      %1308 = vmatpush1.msra.mxu0 0.0
      %1309 = vmatprep.subr.mxu0 0.0
      %1310 = vmatpush1.msra.mxu0 0.0
      %1311 = vmatprep.subr.mxu0 0.0
      %1312 = vmatpush1.msra.mxu0 0.0
      %1313 = vmatprep.subr.mxu0 0.0
      %1314 = vmatpush1.msra.mxu0 0.0
      %1315 = vmatprep.subr.mxu0 0.0
      %1316 = vmatpush1.msra.mxu0 0.0
      %1317 = vmatprep.subr.mxu0 0.0
      %1318 = vmatpush1.msra.mxu0 0.0
      %1319 = vmatprep.subr.mxu0 0.0
      %1320 = vmatpush1.msra.mxu0 0.0
      %1321 = vmatprep.subr.mxu0 0.0
      %1322 = vmatpush1.msra.mxu0 0.0
      %1323 = vmatprep.subr.mxu0 0.0
      %1324 = vmatpush1.msra.mxu0 0.0
      %1325 = vmatprep.subr.mxu0 0.0
      %1326 = vmatpush1.msra.mxu0 0.0
      %1327 = vmatprep.subr.mxu0 0.0
      %1328 = vmatpush1.msra.mxu0 0.0
      %1329 = vmatprep.subr.mxu0 0.0
      %1330 = vmatpush1.msra.mxu0 0.0
      %1331 = vmatprep.subr.mxu0 0.0
      %1332 = vmatpush1.msra.mxu0 0.0
      %1333 = vmatprep.subr.mxu0 0.0
      %1334 = vmatpush1.msra.mxu0 0.0
      %1335 = vmatprep.subr.mxu0 0.0
      %1336 = vmatpush1.msra.mxu0 0.0
      %1337 = vmatprep.subr.mxu0 0.0
      %1338 = vmatpush1.msra.mxu0 0.0
      %1339 = vmatprep.mubr.f32.mxu0 0.0
      %1340 = vmatmul.mubr.f32.gmra.mrb[0].mxu0 %v1270
      %v1341 = vpop.f32.mrb[0].mxu0
      %v1342 = vadd.f32 0.0, %v1341
      %v1343 = vpop.f32.mrb[0].mxu0
      %1344 = vmatprep.mubr.f32.mxu0 0.0
      %1345 = vmatmul.mubr.f32.gmra.mrb[0].mxu0 %v1273
      %v1346 = vpop.f32.mrb[0].mxu0
      %v1347 = vadd.f32 0.0, %v1346
      %v1348 = vpop.f32.mrb[0].mxu0
      %1349 = vdwg.mxu0
      %v1351 = vsel %vm867, %v1057, 0
      %v1354 = vsel %vm867, %v1062, 0
      %1356 = vmatprep.subr.mxu0 0.0
      %1357 = vmatpush1.msra.mxu0 %v857
      %1358 = vmatprep.subr.mxu0 0.0
      %1359 = vmatpush1.msra.mxu0 0.0
      %1360 = vmatprep.subr.mxu0 0.0
      %1361 = vmatpush1.msra.mxu0 0.0
      %1362 = vmatprep.subr.mxu0 0.0
      %1363 = vmatpush1.msra.mxu0 0.0
      %1364 = vmatprep.subr.mxu0 0.0
      %1365 = vmatpush1.msra.mxu0 0.0
      %1366 = vmatprep.subr.mxu0 0.0
      %1367 = vmatpush1.msra.mxu0 0.0
      %1368 = vmatprep.subr.mxu0 0.0
      %1369 = vmatpush1.msra.mxu0 0.0
      %1370 = vmatprep.subr.mxu0 0.0
      %1371 = vmatpush1.msra.mxu0 0.0
      %1372 = vmatprep.subr.mxu0 0.0
      %1373 = vmatpush1.msra.mxu0 0.0
      %1374 = vmatprep.subr.mxu0 0.0
      %1375 = vmatpush1.msra.mxu0 0.0
      %1376 = vmatprep.subr.mxu0 0.0
      %1377 = vmatpush1.msra.mxu0 0.0
      %1378 = vmatprep.subr.mxu0 0.0
      %1379 = vmatpush1.msra.mxu0 0.0
      %1380 = vmatprep.subr.mxu0 0.0
      %1381 = vmatpush1.msra.mxu0 0.0
      %1382 = vmatprep.subr.mxu0 0.0
      %1383 = vmatpush1.msra.mxu0 0.0
      %1384 = vmatprep.subr.mxu0 0.0
      %1385 = vmatpush1.msra.mxu0 0.0
      %1386 = vmatprep.subr.mxu0 0.0
      %1387 = vmatpush1.msra.mxu0 0.0
      %1388 = vmatprep.subr.mxu0 0.0
      %1389 = vmatpush1.msra.mxu0 0.0
      %1390 = vmatprep.subr.mxu0 0.0
      %1391 = vmatpush1.msra.mxu0 0.0
      %1392 = vmatprep.subr.mxu0 0.0
      %1393 = vmatpush1.msra.mxu0 0.0
      %1394 = vmatprep.subr.mxu0 0.0
      %1395 = vmatpush1.msra.mxu0 0.0
      %1396 = vmatprep.subr.mxu0 0.0
      %1397 = vmatpush1.msra.mxu0 0.0
      %1398 = vmatprep.subr.mxu0 0.0
      %1399 = vmatpush1.msra.mxu0 0.0
      %1400 = vmatprep.subr.mxu0 0.0
      %1401 = vmatpush1.msra.mxu0 0.0
      %1402 = vmatprep.subr.mxu0 0.0
      %1403 = vmatpush1.msra.mxu0 0.0
      %1404 = vmatprep.subr.mxu0 0.0
      %1405 = vmatpush1.msra.mxu0 0.0
      %1406 = vmatprep.subr.mxu0 0.0
      %1407 = vmatpush1.msra.mxu0 0.0
      %1408 = vmatprep.subr.mxu0 0.0
      %1409 = vmatpush1.msra.mxu0 0.0
      %1410 = vmatprep.subr.mxu0 0.0
      %1411 = vmatpush1.msra.mxu0 0.0
      %1412 = vmatprep.subr.mxu0 0.0
      %1413 = vmatpush1.msra.mxu0 0.0
      %1414 = vmatprep.subr.mxu0 0.0
      %1415 = vmatpush1.msra.mxu0 0.0
      %1416 = vmatprep.subr.mxu0 0.0
      %1417 = vmatpush1.msra.mxu0 0.0
      %1418 = vmatprep.subr.mxu0 0.0
      %1419 = vmatpush1.msra.mxu0 0.0
      %1420 = vmatprep.mubr.f32.mxu0 0.0
      %1421 = vmatmul.mubr.f32.gmra.mrb[0].mxu0 %v1351
      %v1422 = vpop.f32.mrb[0].mxu0
      %v1423 = vadd.f32 %v1342, %v1422
      %v1424 = vpop.f32.mrb[0].mxu0
      %1425 = vmatprep.mubr.f32.mxu0 0.0
      %1426 = vmatmul.mubr.f32.gmra.mrb[0].mxu0 %v1354
      %v1427 = vpop.f32.mrb[0].mxu0
      %v1428 = vadd.f32 %v1347, %v1427
      %v1429 = vpop.f32.mrb[0].mxu0
      %1430 = vdwg.mxu0
      %1431 = vrot.lane.b32.xlu0 %v849, 112
      %v1432 = vpop.permute.xlu0 %1431
      %1433 = vrot.lane.b32.xlu0 %v854, 112
      %v1434 = vpop.permute.xlu0 %1433
      %1435 = vrot.lane.b32.xlu0 %v849, 80
      %v1436 = vpop.permute.xlu0 %1435
      %1437 = vrot.lane.b32.xlu0 %v854, 80
      %v1438 = vpop.permute.xlu0 %1437
      %v1439 = vsel %vm867, %v1432, 0
      %v1441 = vsel %vm867, %v1434, 0
      %v1443 = vsel %vm867, %v1436, 0
      %v1445 = vsel %vm867, %v1438, 0
      %1447 = vmatprep.subr.mxu0 0.0
      %1448 = vmatpush1.xpose.msra.mxu0 %v1443
      %1449 = vmatprep.subr.mxu0 0.0
      %1450 = vmatpush1.xpose.msra.mxu0 %v1445
      %1451 = vmatprep.subr.mxu0 0.0
      %1452 = vmatpush1.xpose.msra.mxu0 0.0
      %1453 = vmatprep.subr.mxu0 0.0
      %1454 = vmatpush1.xpose.msra.mxu0 0.0
      %1455 = vmatprep.subr.mxu0 0.0
      %1456 = vmatpush1.xpose.msra.mxu0 0.0
      %1457 = vmatprep.subr.mxu0 0.0
      %1458 = vmatpush1.xpose.msra.mxu0 0.0
      %1459 = vmatprep.subr.mxu0 0.0
      %1460 = vmatpush1.xpose.msra.mxu0 0.0
      %1461 = vmatprep.subr.mxu0 0.0
      %1462 = vmatpush1.xpose.msra.mxu0 0.0
      %1463 = vmatprep.subr.mxu0 0.0
      %1464 = vmatpush1.xpose.msra.mxu0 0.0
      %1465 = vmatprep.subr.mxu0 0.0
      %1466 = vmatpush1.xpose.msra.mxu0 0.0
      %1467 = vmatprep.subr.mxu0 0.0
      %1468 = vmatpush1.xpose.msra.mxu0 0.0
      %1469 = vmatprep.subr.mxu0 0.0
      %1470 = vmatpush1.xpose.msra.mxu0 0.0
      %1471 = vmatprep.subr.mxu0 0.0
      %1472 = vmatpush1.xpose.msra.mxu0 0.0
      %1473 = vmatprep.subr.mxu0 0.0
      %1474 = vmatpush1.xpose.msra.mxu0 0.0
      %1475 = vmatprep.subr.mxu0 0.0
      %1476 = vmatpush1.xpose.msra.mxu0 0.0
      %1477 = vmatprep.subr.mxu0 0.0
      %1478 = vmatpush1.xpose.msra.mxu0 0.0
      %1479 = vmatprep.subr.mxu0 0.0
      %1480 = vmatpush1.xpose.msra.mxu0 0.0
      %1481 = vmatprep.subr.mxu0 0.0
      %1482 = vmatpush1.xpose.msra.mxu0 0.0
      %1483 = vmatprep.subr.mxu0 0.0
      %1484 = vmatpush1.xpose.msra.mxu0 0.0
      %1485 = vmatprep.subr.mxu0 0.0
      %1486 = vmatpush1.xpose.msra.mxu0 0.0
      %1487 = vmatprep.subr.mxu0 0.0
      %1488 = vmatpush1.xpose.msra.mxu0 0.0
      %1489 = vmatprep.subr.mxu0 0.0
      %1490 = vmatpush1.xpose.msra.mxu0 0.0
      %1491 = vmatprep.subr.mxu0 0.0
      %1492 = vmatpush1.xpose.msra.mxu0 0.0
      %1493 = vmatprep.subr.mxu0 0.0
      %1494 = vmatpush1.xpose.msra.mxu0 0.0
      %1495 = vmatprep.subr.mxu0 0.0
      %1496 = vmatpush1.xpose.msra.mxu0 0.0
      %1497 = vmatprep.subr.mxu0 0.0
      %1498 = vmatpush1.xpose.msra.mxu0 0.0
      %1499 = vmatprep.subr.mxu0 0.0
      %1500 = vmatpush1.xpose.msra.mxu0 0.0
      %1501 = vmatprep.subr.mxu0 0.0
      %1502 = vmatpush1.xpose.msra.mxu0 0.0
      %1503 = vmatprep.subr.mxu0 0.0
      %1504 = vmatpush1.xpose.msra.mxu0 0.0
      %1505 = vmatprep.subr.mxu0 0.0
      %1506 = vmatpush1.xpose.msra.mxu0 0.0
      %1507 = vmatprep.subr.mxu0 0.0
      %1508 = vmatpush1.xpose.msra.mxu0 0.0
      %1509 = vmatprep.subr.mxu0 0.0
      %1510 = vmatpush1.xpose.msra.mxu0 0.0
      %1511 = vmatprep.mubr.f32.mxu0 0.0
      %1512 = vmatmul.mubr.f32.gmra.mrb[0].mxu0 %v1439
      %v1513 = vpop.f32.mrb[0].mxu0
      %v1514 = vadd.f32 0.0, %v1513
      %v1515 = vpop.f32.mrb[0].mxu0
      %1516 = vmatprep.mubr.f32.mxu0 0.0
      %1517 = vmatmul.mubr.f32.gmra.mrb[0].mxu0 %v1441
      %v1518 = vpop.f32.mrb[0].mxu0
      %v1519 = vadd.f32 0.0, %v1518
      %v1520 = vpop.f32.mrb[0].mxu0
      %1521 = vdwg.mxu0
      %v1522 = vmul.f32 %v1514, 0.35355338
      %v1523 = vmul.f32 %v1519, 0.35355338
      %v1524 = vadd.f32 %v1522, %v717
      %v1525 = vadd.f32 %v1523, %v718
      %v1526 = vsel %vm955, %v1524, -inf
      %1527 = vmax.xlane.f32.xlu0 %v1526
      %v1528 = vpop.xlane.xlu0 %1527
      %v1529 = vsel %vm955, %v1525, -inf
      %1530 = vmax.xlane.f32.xlu0 %v1529
      %v1531 = vpop.xlane.xlu0 %1530
      %v1532 = vsub.f32 %v1524, %v1528
      %v1533 = vsub.f32 %v1525, %v1531
      %v1534 = vmul.f32 %v1532, 1.442695
      %v1535 = vpow.pop %v1534
      %v1536 = vmul.f32 %v1533, 1.442695
      %v1537 = vpow.pop %v1536
      %v1538 = vsel %vm955, %v1535, 0.0
      %1539 = vadd.xlane.f32.xlu0 %v1538
      %v1540 = vpop.xlane.xlu0 %1539
      %v1541 = vsel %vm955, %v1537, 0.0
      %1542 = vadd.xlane.f32.xlu0 %v1541
      %v1543 = vpop.xlane.xlu0 %1542
      %v1544 = vrcp.pop %v1540
      %v1545 = vrcp.pop %v1543
      %v1546 = vmul.f32 %v1535, %v1544
      %v1547 = vmul.f32 %v1537, %v1545
      %1548 = vrot.lane.b32.xlu0 %v849, 48
      %v1549 = vpop.permute.xlu0 %1548
      %1550 = vrot.lane.b32.xlu0 %v854, 48
      %v1551 = vpop.permute.xlu0 %1550
      %v1555 = vsel %vm955, %v1546, 0
      %v1558 = vsel %vm955, %v1547, 0
      %1560 = vmatprep.subr.mxu0 0.0
      %1561 = vmatpush1.msra.mxu0 %v1549
      %1562 = vmatprep.subr.mxu0 0.0
      %1563 = vmatpush1.msra.mxu0 %v1551
      %1564 = vmatprep.subr.mxu0 0.0
      %1565 = vmatpush1.msra.mxu0 0.0
      %1566 = vmatprep.subr.mxu0 0.0
      %1567 = vmatpush1.msra.mxu0 0.0
      %1568 = vmatprep.subr.mxu0 0.0
      %1569 = vmatpush1.msra.mxu0 0.0
      %1570 = vmatprep.subr.mxu0 0.0
      %1571 = vmatpush1.msra.mxu0 0.0
      %1572 = vmatprep.subr.mxu0 0.0
      %1573 = vmatpush1.msra.mxu0 0.0
      %1574 = vmatprep.subr.mxu0 0.0
      %1575 = vmatpush1.msra.mxu0 0.0
      %1576 = vmatprep.subr.mxu0 0.0
      %1577 = vmatpush1.msra.mxu0 0.0
      %1578 = vmatprep.subr.mxu0 0.0
      %1579 = vmatpush1.msra.mxu0 0.0
      %1580 = vmatprep.subr.mxu0 0.0
      %1581 = vmatpush1.msra.mxu0 0.0
      %1582 = vmatprep.subr.mxu0 0.0
      %1583 = vmatpush1.msra.mxu0 0.0
      %1584 = vmatprep.subr.mxu0 0.0
      %1585 = vmatpush1.msra.mxu0 0.0
      %1586 = vmatprep.subr.mxu0 0.0
      %1587 = vmatpush1.msra.mxu0 0.0
      %1588 = vmatprep.subr.mxu0 0.0
      %1589 = vmatpush1.msra.mxu0 0.0
      %1590 = vmatprep.subr.mxu0 0.0
      %1591 = vmatpush1.msra.mxu0 0.0
      %1592 = vmatprep.subr.mxu0 0.0
      %1593 = vmatpush1.msra.mxu0 0.0
      %1594 = vmatprep.subr.mxu0 0.0
      %1595 = vmatpush1.msra.mxu0 0.0
      %1596 = vmatprep.subr.mxu0 0.0
      %1597 = vmatpush1.msra.mxu0 0.0
      %1598 = vmatprep.subr.mxu0 0.0
      %1599 = vmatpush1.msra.mxu0 0.0
      %1600 = vmatprep.subr.mxu0 0.0
      %1601 = vmatpush1.msra.mxu0 0.0
      %1602 = vmatprep.subr.mxu0 0.0
      %1603 = vmatpush1.msra.mxu0 0.0
      %1604 = vmatprep.subr.mxu0 0.0
      %1605 = vmatpush1.msra.mxu0 0.0
      %1606 = vmatprep.subr.mxu0 0.0
      %1607 = vmatpush1.msra.mxu0 0.0
      %1608 = vmatprep.subr.mxu0 0.0
      %1609 = vmatpush1.msra.mxu0 0.0
      %1610 = vmatprep.subr.mxu0 0.0
      %1611 = vmatpush1.msra.mxu0 0.0
      %1612 = vmatprep.subr.mxu0 0.0
      %1613 = vmatpush1.msra.mxu0 0.0
      %1614 = vmatprep.subr.mxu0 0.0
      %1615 = vmatpush1.msra.mxu0 0.0
      %1616 = vmatprep.subr.mxu0 0.0
      %1617 = vmatpush1.msra.mxu0 0.0
      %1618 = vmatprep.subr.mxu0 0.0
      %1619 = vmatpush1.msra.mxu0 0.0
      %1620 = vmatprep.subr.mxu0 0.0
      %1621 = vmatpush1.msra.mxu0 0.0
      %1622 = vmatprep.subr.mxu0 0.0
      %1623 = vmatpush1.msra.mxu0 0.0
      %1624 = vmatprep.mubr.f32.mxu0 0.0
      %1625 = vmatmul.mubr.f32.gmra.mrb[0].mxu0 %v1555
      %v1626 = vpop.f32.mrb[0].mxu0
      %v1627 = vadd.f32 0.0, %v1626
      %v1628 = vpop.f32.mrb[0].mxu0
      %1629 = vmatprep.mubr.f32.mxu0 0.0
      %1630 = vmatmul.mubr.f32.gmra.mrb[0].mxu0 %v1558
      %v1631 = vpop.f32.mrb[0].mxu0
      %v1632 = vadd.f32 0.0, %v1631
      %v1633 = vpop.f32.mrb[0].mxu0
      %1634 = vdwg.mxu0
      %v1636 = vsel %vm867, %v1627, 0
      %v1639 = vsel %vm867, %v1632, 0
      %1641 = vmatprep.subr.mxu0 0.0
      %1642 = vmatpush1.msra.mxu0 %v859
      %1643 = vmatprep.subr.mxu0 0.0
      %1644 = vmatpush1.msra.mxu0 0.0
      %1645 = vmatprep.subr.mxu0 0.0
      %1646 = vmatpush1.msra.mxu0 0.0
      %1647 = vmatprep.subr.mxu0 0.0
      %1648 = vmatpush1.msra.mxu0 0.0
      %1649 = vmatprep.subr.mxu0 0.0
      %1650 = vmatpush1.msra.mxu0 0.0
      %1651 = vmatprep.subr.mxu0 0.0
      %1652 = vmatpush1.msra.mxu0 0.0
      %1653 = vmatprep.subr.mxu0 0.0
      %1654 = vmatpush1.msra.mxu0 0.0
      %1655 = vmatprep.subr.mxu0 0.0
      %1656 = vmatpush1.msra.mxu0 0.0
      %1657 = vmatprep.subr.mxu0 0.0
      %1658 = vmatpush1.msra.mxu0 0.0
      %1659 = vmatprep.subr.mxu0 0.0
      %1660 = vmatpush1.msra.mxu0 0.0
      %1661 = vmatprep.subr.mxu0 0.0
      %1662 = vmatpush1.msra.mxu0 0.0
      %1663 = vmatprep.subr.mxu0 0.0
      %1664 = vmatpush1.msra.mxu0 0.0
      %1665 = vmatprep.subr.mxu0 0.0
      %1666 = vmatpush1.msra.mxu0 0.0
      %1667 = vmatprep.subr.mxu0 0.0
      %1668 = vmatpush1.msra.mxu0 0.0
      %1669 = vmatprep.subr.mxu0 0.0
      %1670 = vmatpush1.msra.mxu0 0.0
      %1671 = vmatprep.subr.mxu0 0.0
      %1672 = vmatpush1.msra.mxu0 0.0
      %1673 = vmatprep.subr.mxu0 0.0
      %1674 = vmatpush1.msra.mxu0 0.0
      %1675 = vmatprep.subr.mxu0 0.0
      %1676 = vmatpush1.msra.mxu0 0.0
      %1677 = vmatprep.subr.mxu0 0.0
      %1678 = vmatpush1.msra.mxu0 0.0
      %1679 = vmatprep.subr.mxu0 0.0
      %1680 = vmatpush1.msra.mxu0 0.0
      %1681 = vmatprep.subr.mxu0 0.0
      %1682 = vmatpush1.msra.mxu0 0.0
      %1683 = vmatprep.subr.mxu0 0.0
      %1684 = vmatpush1.msra.mxu0 0.0
      %1685 = vmatprep.subr.mxu0 0.0
      %1686 = vmatpush1.msra.mxu0 0.0
      %1687 = vmatprep.subr.mxu0 0.0
      %1688 = vmatpush1.msra.mxu0 0.0
      %1689 = vmatprep.subr.mxu0 0.0
      %1690 = vmatpush1.msra.mxu0 0.0
      %1691 = vmatprep.subr.mxu0 0.0
      %1692 = vmatpush1.msra.mxu0 0.0
      %1693 = vmatprep.subr.mxu0 0.0
      %1694 = vmatpush1.msra.mxu0 0.0
      %1695 = vmatprep.subr.mxu0 0.0
      %1696 = vmatpush1.msra.mxu0 0.0
      %1697 = vmatprep.subr.mxu0 0.0
      %1698 = vmatpush1.msra.mxu0 0.0
      %1699 = vmatprep.subr.mxu0 0.0
      %1700 = vmatpush1.msra.mxu0 0.0
      %1701 = vmatprep.subr.mxu0 0.0
      %1702 = vmatpush1.msra.mxu0 0.0
      %1703 = vmatprep.subr.mxu0 0.0
      %1704 = vmatpush1.msra.mxu0 0.0
      %1705 = vmatprep.mubr.f32.mxu0 0.0
      %1706 = vmatmul.mubr.f32.gmra.mrb[0].mxu0 %v1636
      %v1707 = vpop.f32.mrb[0].mxu0
      %v1708 = vadd.f32 0.0, %v1707
      %v1709 = vpop.f32.mrb[0].mxu0
      %1710 = vmatprep.mubr.f32.mxu0 0.0
      %1711 = vmatmul.mubr.f32.gmra.mrb[0].mxu0 %v1639
      %v1712 = vpop.f32.mrb[0].mxu0
      %v1713 = vadd.f32 0.0, %v1712
      %v1714 = vpop.f32.mrb[0].mxu0
      %1715 = vdwg.mxu0
      %v1716 = vadd.f32 %v1423, %v1708
      %v1717 = vadd.f32 %v1428, %v1713
      %1718 = vrot.lane.b32.xlu0 %v849, 104
      %v1719 = vpop.permute.xlu0 %1718
      %1720 = vrot.lane.b32.xlu0 %v854, 104
      %v1721 = vpop.permute.xlu0 %1720
      %1722 = vrot.lane.b32.xlu0 %v849, 72
      %v1723 = vpop.permute.xlu0 %1722
      %1724 = vrot.lane.b32.xlu0 %v854, 72
      %v1725 = vpop.permute.xlu0 %1724
      %v1726 = vsel %vm867, %v1719, 0
      %v1728 = vsel %vm867, %v1721, 0
      %v1730 = vsel %vm867, %v1723, 0
      %v1732 = vsel %vm867, %v1725, 0
      %1734 = vmatprep.subr.mxu0 0.0
      %1735 = vmatpush1.xpose.msra.mxu0 %v1730
      %1736 = vmatprep.subr.mxu0 0.0
      %1737 = vmatpush1.xpose.msra.mxu0 %v1732
      %1738 = vmatprep.subr.mxu0 0.0
      %1739 = vmatpush1.xpose.msra.mxu0 0.0
      %1740 = vmatprep.subr.mxu0 0.0
      %1741 = vmatpush1.xpose.msra.mxu0 0.0
      %1742 = vmatprep.subr.mxu0 0.0
      %1743 = vmatpush1.xpose.msra.mxu0 0.0
      %1744 = vmatprep.subr.mxu0 0.0
      %1745 = vmatpush1.xpose.msra.mxu0 0.0
      %1746 = vmatprep.subr.mxu0 0.0
      %1747 = vmatpush1.xpose.msra.mxu0 0.0
      %1748 = vmatprep.subr.mxu0 0.0
      %1749 = vmatpush1.xpose.msra.mxu0 0.0
      %1750 = vmatprep.subr.mxu0 0.0
      %1751 = vmatpush1.xpose.msra.mxu0 0.0
      %1752 = vmatprep.subr.mxu0 0.0
      %1753 = vmatpush1.xpose.msra.mxu0 0.0
      %1754 = vmatprep.subr.mxu0 0.0
      %1755 = vmatpush1.xpose.msra.mxu0 0.0
      %1756 = vmatprep.subr.mxu0 0.0
      %1757 = vmatpush1.xpose.msra.mxu0 0.0
      %1758 = vmatprep.subr.mxu0 0.0
      %1759 = vmatpush1.xpose.msra.mxu0 0.0
      %1760 = vmatprep.subr.mxu0 0.0
      %1761 = vmatpush1.xpose.msra.mxu0 0.0
      %1762 = vmatprep.subr.mxu0 0.0
      %1763 = vmatpush1.xpose.msra.mxu0 0.0
      %1764 = vmatprep.subr.mxu0 0.0
      %1765 = vmatpush1.xpose.msra.mxu0 0.0
      %1766 = vmatprep.subr.mxu0 0.0
      %1767 = vmatpush1.xpose.msra.mxu0 0.0
      %1768 = vmatprep.subr.mxu0 0.0
      %1769 = vmatpush1.xpose.msra.mxu0 0.0
      %1770 = vmatprep.subr.mxu0 0.0
      %1771 = vmatpush1.xpose.msra.mxu0 0.0
      %1772 = vmatprep.subr.mxu0 0.0
      %1773 = vmatpush1.xpose.msra.mxu0 0.0
      %1774 = vmatprep.subr.mxu0 0.0
      %1775 = vmatpush1.xpose.msra.mxu0 0.0
      %1776 = vmatprep.subr.mxu0 0.0
      %1777 = vmatpush1.xpose.msra.mxu0 0.0
      %1778 = vmatprep.subr.mxu0 0.0
      %1779 = vmatpush1.xpose.msra.mxu0 0.0
      %1780 = vmatprep.subr.mxu0 0.0
      %1781 = vmatpush1.xpose.msra.mxu0 0.0
      %1782 = vmatprep.subr.mxu0 0.0
      %1783 = vmatpush1.xpose.msra.mxu0 0.0
      %1784 = vmatprep.subr.mxu0 0.0
      %1785 = vmatpush1.xpose.msra.mxu0 0.0
      %1786 = vmatprep.subr.mxu0 0.0
      %1787 = vmatpush1.xpose.msra.mxu0 0.0
      %1788 = vmatprep.subr.mxu0 0.0
      %1789 = vmatpush1.xpose.msra.mxu0 0.0
      %1790 = vmatprep.subr.mxu0 0.0
      %1791 = vmatpush1.xpose.msra.mxu0 0.0
      %1792 = vmatprep.subr.mxu0 0.0
      %1793 = vmatpush1.xpose.msra.mxu0 0.0
      %1794 = vmatprep.subr.mxu0 0.0
      %1795 = vmatpush1.xpose.msra.mxu0 0.0
      %1796 = vmatprep.subr.mxu0 0.0
      %1797 = vmatpush1.xpose.msra.mxu0 0.0
      %1798 = vmatprep.mubr.f32.mxu0 0.0
      %1799 = vmatmul.mubr.f32.gmra.mrb[0].mxu0 %v1726
      %v1800 = vpop.f32.mrb[0].mxu0
      %v1801 = vadd.f32 0.0, %v1800
      %v1802 = vpop.f32.mrb[0].mxu0
      %1803 = vmatprep.mubr.f32.mxu0 0.0
      %1804 = vmatmul.mubr.f32.gmra.mrb[0].mxu0 %v1728
      %v1805 = vpop.f32.mrb[0].mxu0
      %v1806 = vadd.f32 0.0, %v1805
      %v1807 = vpop.f32.mrb[0].mxu0
      %1808 = vdwg.mxu0
      %v1809 = vmul.f32 %v1801, 0.35355338
      %v1810 = vmul.f32 %v1806, 0.35355338
      %v1811 = vadd.f32 %v1809, %v717
      %v1812 = vadd.f32 %v1810, %v718
      %v1813 = vsel %vm955, %v1811, -inf
      %1814 = vmax.xlane.f32.xlu0 %v1813
      %v1815 = vpop.xlane.xlu0 %1814
      %v1816 = vsel %vm955, %v1812, -inf
      %1817 = vmax.xlane.f32.xlu0 %v1816
      %v1818 = vpop.xlane.xlu0 %1817
      %v1819 = vsub.f32 %v1811, %v1815
      %v1820 = vsub.f32 %v1812, %v1818
      %v1821 = vmul.f32 %v1819, 1.442695
      %v1822 = vpow.pop %v1821
      %v1823 = vmul.f32 %v1820, 1.442695
      %v1824 = vpow.pop %v1823
      %v1825 = vsel %vm955, %v1822, 0.0
      %1826 = vadd.xlane.f32.xlu0 %v1825
      %v1827 = vpop.xlane.xlu0 %1826
      %v1828 = vsel %vm955, %v1824, 0.0
      %1829 = vadd.xlane.f32.xlu0 %v1828
      %v1830 = vpop.xlane.xlu0 %1829
      %v1831 = vrcp.pop %v1827
      %v1832 = vrcp.pop %v1830
      %v1833 = vmul.f32 %v1822, %v1831
      %v1834 = vmul.f32 %v1824, %v1832
      %1835 = vrot.lane.b32.xlu0 %v849, 40
      %v1836 = vpop.permute.xlu0 %1835
      %1837 = vrot.lane.b32.xlu0 %v854, 40
      %v1838 = vpop.permute.xlu0 %1837
      %v1842 = vsel %vm955, %v1833, 0
      %v1845 = vsel %vm955, %v1834, 0
      %1847 = vmatprep.subr.mxu0 0.0
      %1848 = vmatpush1.msra.mxu0 %v1836
      %1849 = vmatprep.subr.mxu0 0.0
      %1850 = vmatpush1.msra.mxu0 %v1838
      %1851 = vmatprep.subr.mxu0 0.0
      %1852 = vmatpush1.msra.mxu0 0.0
      %1853 = vmatprep.subr.mxu0 0.0
      %1854 = vmatpush1.msra.mxu0 0.0
      %1855 = vmatprep.subr.mxu0 0.0
      %1856 = vmatpush1.msra.mxu0 0.0
      %1857 = vmatprep.subr.mxu0 0.0
      %1858 = vmatpush1.msra.mxu0 0.0
      %1859 = vmatprep.subr.mxu0 0.0
      %1860 = vmatpush1.msra.mxu0 0.0
      %1861 = vmatprep.subr.mxu0 0.0
      %1862 = vmatpush1.msra.mxu0 0.0
      %1863 = vmatprep.subr.mxu0 0.0
      %1864 = vmatpush1.msra.mxu0 0.0
      %1865 = vmatprep.subr.mxu0 0.0
      %1866 = vmatpush1.msra.mxu0 0.0
      %1867 = vmatprep.subr.mxu0 0.0
      %1868 = vmatpush1.msra.mxu0 0.0
      %1869 = vmatprep.subr.mxu0 0.0
      %1870 = vmatpush1.msra.mxu0 0.0
      %1871 = vmatprep.subr.mxu0 0.0
      %1872 = vmatpush1.msra.mxu0 0.0
      %1873 = vmatprep.subr.mxu0 0.0
      %1874 = vmatpush1.msra.mxu0 0.0
      %1875 = vmatprep.subr.mxu0 0.0
      %1876 = vmatpush1.msra.mxu0 0.0
      %1877 = vmatprep.subr.mxu0 0.0
      %1878 = vmatpush1.msra.mxu0 0.0
      %1879 = vmatprep.subr.mxu0 0.0
      %1880 = vmatpush1.msra.mxu0 0.0
      %1881 = vmatprep.subr.mxu0 0.0
      %1882 = vmatpush1.msra.mxu0 0.0
      %1883 = vmatprep.subr.mxu0 0.0
      %1884 = vmatpush1.msra.mxu0 0.0
      %1885 = vmatprep.subr.mxu0 0.0
      %1886 = vmatpush1.msra.mxu0 0.0
      %1887 = vmatprep.subr.mxu0 0.0
      %1888 = vmatpush1.msra.mxu0 0.0
      %1889 = vmatprep.subr.mxu0 0.0
      %1890 = vmatpush1.msra.mxu0 0.0
      %1891 = vmatprep.subr.mxu0 0.0
      %1892 = vmatpush1.msra.mxu0 0.0
      %1893 = vmatprep.subr.mxu0 0.0
      %1894 = vmatpush1.msra.mxu0 0.0
      %1895 = vmatprep.subr.mxu0 0.0
      %1896 = vmatpush1.msra.mxu0 0.0
      %1897 = vmatprep.subr.mxu0 0.0
      %1898 = vmatpush1.msra.mxu0 0.0
      %1899 = vmatprep.subr.mxu0 0.0
      %1900 = vmatpush1.msra.mxu0 0.0
      %1901 = vmatprep.subr.mxu0 0.0
      %1902 = vmatpush1.msra.mxu0 0.0
      %1903 = vmatprep.subr.mxu0 0.0
      %1904 = vmatpush1.msra.mxu0 0.0
      %1905 = vmatprep.subr.mxu0 0.0
      %1906 = vmatpush1.msra.mxu0 0.0
      %1907 = vmatprep.subr.mxu0 0.0
      %1908 = vmatpush1.msra.mxu0 0.0
      %1909 = vmatprep.subr.mxu0 0.0
      %1910 = vmatpush1.msra.mxu0 0.0
      %1911 = vmatprep.mubr.f32.mxu0 0.0
      %1912 = vmatmul.mubr.f32.gmra.mrb[0].mxu0 %v1842
      %v1913 = vpop.f32.mrb[0].mxu0
      %v1914 = vadd.f32 0.0, %v1913
      %v1915 = vpop.f32.mrb[0].mxu0
      %1916 = vmatprep.mubr.f32.mxu0 0.0
      %1917 = vmatmul.mubr.f32.gmra.mrb[0].mxu0 %v1845
      %v1918 = vpop.f32.mrb[0].mxu0
      %v1919 = vadd.f32 0.0, %v1918
      %v1920 = vpop.f32.mrb[0].mxu0
      %1921 = vdwg.mxu0
      %v1923 = vsel %vm867, %v1914, 0
      %v1926 = vsel %vm867, %v1919, 0
      %1928 = vmatprep.subr.mxu0 0.0
      %1929 = vmatpush1.msra.mxu0 %v860
      %1930 = vmatprep.subr.mxu0 0.0
      %1931 = vmatpush1.msra.mxu0 0.0
      %1932 = vmatprep.subr.mxu0 0.0
      %1933 = vmatpush1.msra.mxu0 0.0
      %1934 = vmatprep.subr.mxu0 0.0
      %1935 = vmatpush1.msra.mxu0 0.0
      %1936 = vmatprep.subr.mxu0 0.0
      %1937 = vmatpush1.msra.mxu0 0.0
      %1938 = vmatprep.subr.mxu0 0.0
      %1939 = vmatpush1.msra.mxu0 0.0
      %1940 = vmatprep.subr.mxu0 0.0
      %1941 = vmatpush1.msra.mxu0 0.0
      %1942 = vmatprep.subr.mxu0 0.0
      %1943 = vmatpush1.msra.mxu0 0.0
      %1944 = vmatprep.subr.mxu0 0.0
      %1945 = vmatpush1.msra.mxu0 0.0
      %1946 = vmatprep.subr.mxu0 0.0
      %1947 = vmatpush1.msra.mxu0 0.0
      %1948 = vmatprep.subr.mxu0 0.0
      %1949 = vmatpush1.msra.mxu0 0.0
      %1950 = vmatprep.subr.mxu0 0.0
      %1951 = vmatpush1.msra.mxu0 0.0
      %1952 = vmatprep.subr.mxu0 0.0
      %1953 = vmatpush1.msra.mxu0 0.0
      %1954 = vmatprep.subr.mxu0 0.0
      %1955 = vmatpush1.msra.mxu0 0.0
      %1956 = vmatprep.subr.mxu0 0.0
      %1957 = vmatpush1.msra.mxu0 0.0
      %1958 = vmatprep.subr.mxu0 0.0
      %1959 = vmatpush1.msra.mxu0 0.0
      %1960 = vmatprep.subr.mxu0 0.0
      %1961 = vmatpush1.msra.mxu0 0.0
      %1962 = vmatprep.subr.mxu0 0.0
      %1963 = vmatpush1.msra.mxu0 0.0
      %1964 = vmatprep.subr.mxu0 0.0
      %1965 = vmatpush1.msra.mxu0 0.0
      %1966 = vmatprep.subr.mxu0 0.0
      %1967 = vmatpush1.msra.mxu0 0.0
      %1968 = vmatprep.subr.mxu0 0.0
      %1969 = vmatpush1.msra.mxu0 0.0
      %1970 = vmatprep.subr.mxu0 0.0
      %1971 = vmatpush1.msra.mxu0 0.0
      %1972 = vmatprep.subr.mxu0 0.0
      %1973 = vmatpush1.msra.mxu0 0.0
      %1974 = vmatprep.subr.mxu0 0.0
      %1975 = vmatpush1.msra.mxu0 0.0
      %1976 = vmatprep.subr.mxu0 0.0
      %1977 = vmatpush1.msra.mxu0 0.0
      %1978 = vmatprep.subr.mxu0 0.0
      %1979 = vmatpush1.msra.mxu0 0.0
      %1980 = vmatprep.subr.mxu0 0.0
      %1981 = vmatpush1.msra.mxu0 0.0
      %1982 = vmatprep.subr.mxu0 0.0
      %1983 = vmatpush1.msra.mxu0 0.0
      %1984 = vmatprep.subr.mxu0 0.0
      %1985 = vmatpush1.msra.mxu0 0.0
      %1986 = vmatprep.subr.mxu0 0.0
      %1987 = vmatpush1.msra.mxu0 0.0
      %1988 = vmatprep.subr.mxu0 0.0
      %1989 = vmatpush1.msra.mxu0 0.0
      %1990 = vmatprep.subr.mxu0 0.0
      %1991 = vmatpush1.msra.mxu0 0.0
      %1992 = vmatprep.mubr.f32.mxu0 0.0
      %1993 = vmatmul.mubr.f32.gmra.mrb[0].mxu0 %v1923
      %v1994 = vpop.f32.mrb[0].mxu0
      %v1995 = vadd.f32 0.0, %v1994
      %v1996 = vpop.f32.mrb[0].mxu0
      %1997 = vmatprep.mubr.f32.mxu0 0.0
      %1998 = vmatmul.mubr.f32.gmra.mrb[0].mxu0 %v1926
      %v1999 = vpop.f32.mrb[0].mxu0
      %v2000 = vadd.f32 0.0, %v1999
      %v2001 = vpop.f32.mrb[0].mxu0
      %2002 = vdwg.mxu0
      %v2003 = vadd.f32 %v1716, %v1995
      %v2004 = vadd.f32 %v1717, %v2000
      %v2005 = vadd.f32 %v715, %v2003
      %v2006 = vadd.f32 %v716, %v2004
      %v2007 = vld [vmem:[%s683] sm:$0x1]
      %v2009 = vlaneseq
      %v2010 = vshrl.u32 %v2009, 7
      %v2011 = vsub.s32 0, %v2010
      %v2012 = vrot.slane %v2007, %v2011
      %v2014 = vadd.f32 %v2005, %v2012
      %v2015 = vadd.f32 %v2006, %v2012
      %v2016 = vld [vmem:[%s686] sm:$0x1]
      %v2017 = vld [vmem:[%s689] sm:$0x1]
      %v2018 = vsel %vm721, %v2014, 0.0
      %2019 = vadd.xlane.f32.xlu0 %v2018
      %v2020 = vpop.xlane.xlu0 %2019
      %v2021 = vsel %vm721, %v2015, 0.0
      %2022 = vadd.xlane.f32.xlu0 %v2021
      %v2023 = vpop.xlane.xlu0 %2022
      %v2024 = vmul.f32 %v2020, %v728
      %v2025 = vmul.f32 %v2023, %v728
      %v2026 = vsub.f32 %v2014, %v2024
      %v2027 = vsub.f32 %v2015, %v2025
      %v2028 = vmul.f32 %v2026, %v2026
      %v2029 = vmul.f32 %v2027, %v2027
      %v2030 = vsel %vm721, %v2028, 0.0
      %2031 = vadd.xlane.f32.xlu0 %v2030
      %v2032 = vpop.xlane.xlu0 %2031
      %v2033 = vsel %vm721, %v2029, 0.0
      %2034 = vadd.xlane.f32.xlu0 %v2033
      %v2035 = vpop.xlane.xlu0 %2034
      %v2036 = vmul.f32 %v2032, %v728
      %v2037 = vmul.f32 %v2035, %v728
      %v2038 = vadd.f32 %v2036, 1e-05
      %v2039 = vadd.f32 %v2037, 1e-05
      %v2040 = vrsqrt.pop %v2038
      %v2041 = vrsqrt.pop %v2039
      %v2042 = vmul.f32 %v2026, %v2040
      %v2043 = vmul.f32 %v2027, %v2041
      %v2045 = vlaneseq
      %v2046 = vshrl.u32 %v2045, 7
      %v2047 = vsub.s32 0, %v2046
      %v2048 = vrot.slane %v2016, %v2047
      %v2050 = vmul.f32 %v2042, %v2048
      %v2051 = vmul.f32 %v2043, %v2048
      %v2053 = vlaneseq
      %v2054 = vshrl.u32 %v2053, 7
      %v2055 = vsub.s32 0, %v2054
      %v2056 = vrot.slane %v2017, %v2055
      %v2058 = vadd.f32 %v2050, %v2056
      %v2059 = vadd.f32 %v2051, %v2056
      %v2060 = vld [vmem:[%s694] sm:$0xff]
      %v2061 = vld [vmem:[%s694 + $0x8] sm:$0xff]
      %v2062 = vld [vmem:[%s694 + $0x10] sm:$0xff]
      %v2063 = vld [vmem:[%s694 + $0x18] sm:$0xff]
      %v2064 = vld [vmem:[%s697] sm:$0x1]
      %v2066 = vlaneseq
      %v2067 = vshrl.u32 %v2066, 7
      %v2068 = vsub.s32 0, %v2067
      %v2069 = vrot.slane %v2064, %v2068
      %v2072 = vsel %vm721, %v2058, 0
      %v2075 = vsel %vm721, %v2059, 0
      %2077 = vmatprep.subr.mxu0 0.0
      %2078 = vmatpush1.msra.mxu0 %v2060
      %2079 = vmatprep.subr.mxu0 0.0
      %2080 = vmatpush1.msra.mxu0 %v2061
      %2081 = vmatprep.subr.mxu0 0.0
      %2082 = vmatpush1.msra.mxu0 %v2062
      %2083 = vmatprep.subr.mxu0 0.0
      %2084 = vmatpush1.msra.mxu0 %v2063
      %2085 = vmatprep.subr.mxu0 0.0
      %2086 = vmatpush1.msra.mxu0 0.0
      %2087 = vmatprep.subr.mxu0 0.0
      %2088 = vmatpush1.msra.mxu0 0.0
      %2089 = vmatprep.subr.mxu0 0.0
      %2090 = vmatpush1.msra.mxu0 0.0
      %2091 = vmatprep.subr.mxu0 0.0
      %2092 = vmatpush1.msra.mxu0 0.0
      %2093 = vmatprep.subr.mxu0 0.0
      %2094 = vmatpush1.msra.mxu0 0.0
      %2095 = vmatprep.subr.mxu0 0.0
      %2096 = vmatpush1.msra.mxu0 0.0
      %2097 = vmatprep.subr.mxu0 0.0
      %2098 = vmatpush1.msra.mxu0 0.0
      %2099 = vmatprep.subr.mxu0 0.0
      %2100 = vmatpush1.msra.mxu0 0.0
      %2101 = vmatprep.subr.mxu0 0.0
      %2102 = vmatpush1.msra.mxu0 0.0
      %2103 = vmatprep.subr.mxu0 0.0
      %2104 = vmatpush1.msra.mxu0 0.0
      %2105 = vmatprep.subr.mxu0 0.0
      %2106 = vmatpush1.msra.mxu0 0.0
      %2107 = vmatprep.subr.mxu0 0.0
      %2108 = vmatpush1.msra.mxu0 0.0
      %2109 = vmatprep.subr.mxu0 0.0
      %2110 = vmatpush1.msra.mxu0 0.0
      %2111 = vmatprep.subr.mxu0 0.0
      %2112 = vmatpush1.msra.mxu0 0.0
      %2113 = vmatprep.subr.mxu0 0.0
      %2114 = vmatpush1.msra.mxu0 0.0
      %2115 = vmatprep.subr.mxu0 0.0
      %2116 = vmatpush1.msra.mxu0 0.0
      %2117 = vmatprep.subr.mxu0 0.0
      %2118 = vmatpush1.msra.mxu0 0.0
      %2119 = vmatprep.subr.mxu0 0.0
      %2120 = vmatpush1.msra.mxu0 0.0
      %2121 = vmatprep.subr.mxu0 0.0
      %2122 = vmatpush1.msra.mxu0 0.0
      %2123 = vmatprep.subr.mxu0 0.0
      %2124 = vmatpush1.msra.mxu0 0.0
      %2125 = vmatprep.subr.mxu0 0.0
      %2126 = vmatpush1.msra.mxu0 0.0
      %2127 = vmatprep.subr.mxu0 0.0
      %2128 = vmatpush1.msra.mxu0 0.0
      %2129 = vmatprep.subr.mxu0 0.0
      %2130 = vmatpush1.msra.mxu0 0.0
      %2131 = vmatprep.subr.mxu0 0.0
      %2132 = vmatpush1.msra.mxu0 0.0
      %2133 = vmatprep.subr.mxu0 0.0
      %2134 = vmatpush1.msra.mxu0 0.0
      %2135 = vmatprep.subr.mxu0 0.0
      %2136 = vmatpush1.msra.mxu0 0.0
      %2137 = vmatprep.subr.mxu0 0.0
      %2138 = vmatpush1.msra.mxu0 0.0
      %2139 = vmatprep.subr.mxu0 0.0
      %2140 = vmatpush1.msra.mxu0 0.0
      %2141 = vmatprep.mubr.f32.mxu0 0.0
      %2142 = vmatmul.mubr.f32.gmra.mrb[0].mxu0 %v2072
      %v2143 = vpop.f32.mrb[0].mxu0
      %v2144 = vadd.f32 %v2069, %v2143
      %v2145 = vpop.f32.mrb[0].mxu0
      %2146 = vmatprep.mubr.f32.mxu0 0.0
      %2147 = vmatmul.mubr.f32.gmra.mrb[0].mxu0 %v2075
      %v2148 = vpop.f32.mrb[0].mxu0
      %v2149 = vadd.f32 %v2069, %v2148
      %v2150 = vpop.f32.mrb[0].mxu0
      %2151 = vdwg.mxu0
      %v2152 = vmul.f32 %v2144, 0.5
      %v2153 = vmul.f32 %v2149, 0.5
      %v2154 = vmul.f32 %v2144, 0.044715
      %v2155 = vmul.f32 %v2149, 0.044715
      %v2156 = vmul.f32 %v2154, %v2144
      %v2157 = vmul.f32 %v2155, %v2149
      %v2158 = vmul.f32 %v2156, %v2144
      %v2159 = vmul.f32 %v2157, %v2149
      %v2160 = vadd.f32 %v2144, %v2158
      %v2161 = vadd.f32 %v2149, %v2159
      %v2162 = vmul.f32 %v2160, 0.7978846
      %v2163 = vmul.f32 %v2161, 0.7978846
      %v2164 = vtanh.pop %v2162
      %v2165 = vtanh.pop %v2163
      %v2166 = vadd.f32 %v2164, 1.0
      %v2167 = vadd.f32 %v2165, 1.0
      %v2168 = vmul.f32 %v2152, %v2166
      %v2169 = vmul.f32 %v2153, %v2167
      %v2170 = vld [vmem:[%s702] sm:$0xff]
      %v2171 = vld [vmem:[%s702 + $0x8] sm:$0xff]
      %v2172 = vld [vmem:[%s702 + $0x10] sm:$0xff]
      %v2173 = vld [vmem:[%s702 + $0x18] sm:$0xff]
      %v2174 = vld [vmem:[%s702 + $0x20] sm:$0xff]
      %v2175 = vld [vmem:[%s702 + $0x28] sm:$0xff]
      %v2176 = vld [vmem:[%s702 + $0x30] sm:$0xff]
      %v2177 = vld [vmem:[%s702 + $0x38] sm:$0xff]
      %v2178 = vld [vmem:[%s702 + $0x40] sm:$0xff]
      %v2179 = vld [vmem:[%s702 + $0x48] sm:$0xff]
      %v2180 = vld [vmem:[%s702 + $0x50] sm:$0xff]
      %v2181 = vld [vmem:[%s702 + $0x58] sm:$0xff]
      %v2182 = vld [vmem:[%s702 + $0x60] sm:$0xff]
      %v2183 = vld [vmem:[%s702 + $0x68] sm:$0xff]
      %v2184 = vld [vmem:[%s702 + $0x70] sm:$0xff]
      %v2185 = vld [vmem:[%s702 + $0x78] sm:$0xff]
      %2186 = vmatprep.subr.mxu0 0.0
      %2187 = vmatpush1.msra.mxu0 %v2170
      %2188 = vmatprep.subr.mxu0 0.0
      %2189 = vmatpush1.msra.mxu0 %v2171
      %2190 = vmatprep.subr.mxu0 0.0
      %2191 = vmatpush1.msra.mxu0 %v2172
      %2192 = vmatprep.subr.mxu0 0.0
      %2193 = vmatpush1.msra.mxu0 %v2173
      %2194 = vmatprep.subr.mxu0 0.0
      %2195 = vmatpush1.msra.mxu0 %v2174
      %2196 = vmatprep.subr.mxu0 0.0
      %2197 = vmatpush1.msra.mxu0 %v2175
      %2198 = vmatprep.subr.mxu0 0.0
      %2199 = vmatpush1.msra.mxu0 %v2176
      %2200 = vmatprep.subr.mxu0 0.0
      %2201 = vmatpush1.msra.mxu0 %v2177
      %2202 = vmatprep.subr.mxu0 0.0
      %2203 = vmatpush1.msra.mxu0 %v2178
      %2204 = vmatprep.subr.mxu0 0.0
      %2205 = vmatpush1.msra.mxu0 %v2179
      %2206 = vmatprep.subr.mxu0 0.0
      %2207 = vmatpush1.msra.mxu0 %v2180
      %2208 = vmatprep.subr.mxu0 0.0
      %2209 = vmatpush1.msra.mxu0 %v2181
      %2210 = vmatprep.subr.mxu0 0.0
      %2211 = vmatpush1.msra.mxu0 %v2182
      %2212 = vmatprep.subr.mxu0 0.0
      %2213 = vmatpush1.msra.mxu0 %v2183
      %2214 = vmatprep.subr.mxu0 0.0
      %2215 = vmatpush1.msra.mxu0 %v2184
      %2216 = vmatprep.subr.mxu0 0.0
      %2217 = vmatpush1.msra.mxu0 %v2185
      %2218 = vmatprep.subr.mxu0 0.0
      %2219 = vmatpush1.msra.mxu0 0.0
      %2220 = vmatprep.subr.mxu0 0.0
      %2221 = vmatpush1.msra.mxu0 0.0
      %2222 = vmatprep.subr.mxu0 0.0
      %2223 = vmatpush1.msra.mxu0 0.0
      %2224 = vmatprep.subr.mxu0 0.0
      %2225 = vmatpush1.msra.mxu0 0.0
      %2226 = vmatprep.subr.mxu0 0.0
      %2227 = vmatpush1.msra.mxu0 0.0
      %2228 = vmatprep.subr.mxu0 0.0
      %2229 = vmatpush1.msra.mxu0 0.0
      %2230 = vmatprep.subr.mxu0 0.0
      %2231 = vmatpush1.msra.mxu0 0.0
      %2232 = vmatprep.subr.mxu0 0.0
      %2233 = vmatpush1.msra.mxu0 0.0
      %2234 = vmatprep.subr.mxu0 0.0
      %2235 = vmatpush1.msra.mxu0 0.0
      %2236 = vmatprep.subr.mxu0 0.0
      %2237 = vmatpush1.msra.mxu0 0.0
      %2238 = vmatprep.subr.mxu0 0.0
      %2239 = vmatpush1.msra.mxu0 0.0
      %2240 = vmatprep.subr.mxu0 0.0
      %2241 = vmatpush1.msra.mxu0 0.0
      %2242 = vmatprep.subr.mxu0 0.0
      %2243 = vmatpush1.msra.mxu0 0.0
      %2244 = vmatprep.subr.mxu0 0.0
      %2245 = vmatpush1.msra.mxu0 0.0
      %2246 = vmatprep.subr.mxu0 0.0
      %2247 = vmatpush1.msra.mxu0 0.0
      %2248 = vmatprep.subr.mxu0 0.0
      %2249 = vmatpush1.msra.mxu0 0.0
      %2250 = vmatprep.mubr.f32.mxu0 0.0
      %2251 = vmatmul.mubr.f32.gmra.mrb[0].mxu0 %v2168
      %v2252 = vpop.f32.mrb[0].mxu0
      %v2253 = vadd.f32 0.0, %v2252
      %v2254 = vpop.f32.mrb[0].mxu0
      %2255 = vmatprep.mubr.f32.mxu0 0.0
      %2256 = vmatmul.mubr.f32.gmra.mrb[0].mxu0 %v2169
      %v2257 = vpop.f32.mrb[0].mxu0
      %v2258 = vadd.f32 0.0, %v2257
      %v2259 = vpop.f32.mrb[0].mxu0
      %2260 = vdwg.mxu0
      %v2261 = vadd.f32 %v2014, %v2253
      %v2262 = vadd.f32 %v2015, %v2258
      %v2263 = vld [vmem:[%s705] sm:$0x1]
      %v2265 = vlaneseq
      %v2266 = vshrl.u32 %v2265, 7
      %v2267 = vsub.s32 0, %v2266
      %v2268 = vrot.slane %v2263, %v2267
      %v2270 = vadd.f32 %v2261, %v2268
      %v2271 = vadd.f32 %v2262, %v2268
      %2272 = vst.msk [vmem:[#allocation2] sm:$0xff] %vm721, %v2270
      %2273 = vst.msk [vmem:[#allocation2 + $0x8] sm:$0xff] %vm721, %v2271
      %p2274 = scmp.eq.s32.totalorder %s28, 1
      // Predicated region
      $region93: #{_lambda_.1} parent=87 // pred_check
        %p2275 = pneg %p2274
      $region94: #{_lambda_.1} parent=87 // pred_check_branch
        %2277 = sbr.rel (%p2275) target = $region96
      $region95: #{_lambda_.1} parent=87 // pred_region
        %v2278 = vld [vmem:[%s14] sm:$0x1]
        %v2279 = vld [vmem:[%s15] sm:$0x1]
        %v2280 = vsel %vm721, %v2270, 0.0
        %2281 = vadd.xlane.f32.xlu0 %v2280
        %v2282 = vpop.xlane.xlu0 %2281
        %v2283 = vsel %vm721, %v2271, 0.0
        %2284 = vadd.xlane.f32.xlu0 %v2283
        %v2285 = vpop.xlane.xlu0 %2284
        %v2286 = vmul.f32 %v2282, %v728
        %v2287 = vmul.f32 %v2285, %v728
        %v2288 = vsub.f32 %v2270, %v2286
        %v2289 = vsub.f32 %v2271, %v2287
        %v2290 = vmul.f32 %v2288, %v2288
        %v2291 = vmul.f32 %v2289, %v2289
        %v2292 = vsel %vm721, %v2290, 0.0
        %2293 = vadd.xlane.f32.xlu0 %v2292
        %v2294 = vpop.xlane.xlu0 %2293
        %v2295 = vsel %vm721, %v2291, 0.0
        %2296 = vadd.xlane.f32.xlu0 %v2295
        %v2297 = vpop.xlane.xlu0 %2296
        %v2298 = vmul.f32 %v2294, %v728
        %v2299 = vmul.f32 %v2297, %v728
        %v2300 = vadd.f32 %v2298, 1e-05
        %v2301 = vadd.f32 %v2299, 1e-05
        %v2302 = vrsqrt.pop %v2300
        %v2303 = vrsqrt.pop %v2301
        %v2304 = vmul.f32 %v2288, %v2302
        %v2305 = vmul.f32 %v2289, %v2303
        %v2307 = vlaneseq
        %v2308 = vshrl.u32 %v2307, 7
        %v2309 = vsub.s32 0, %v2308
        %v2310 = vrot.slane %v2278, %v2309
        %v2312 = vmul.f32 %v2304, %v2310
        %v2313 = vmul.f32 %v2305, %v2310
        %v2315 = vlaneseq
        %v2316 = vshrl.u32 %v2315, 7
        %v2317 = vsub.s32 0, %v2316
        %v2318 = vrot.slane %v2279, %v2317
        %v2320 = vadd.f32 %v2312, %v2318
        %v2321 = vadd.f32 %v2313, %v2318
        %v2322 = vld [vmem:[%s16] sm:$0xff]
        %v2323 = vld [vmem:[%s16 + $0x8] sm:$0xff]
        %v2324 = vld [vmem:[%s16 + $0x10] sm:$0xff]
        %v2325 = vld [vmem:[%s16 + $0x18] sm:$0xff]
        %v2327 = vsel %vm721, %v2320, 0
        %v2330 = vsel %vm721, %v2321, 0
        %2332 = vmatprep.subr.mxu0 0.0
        %2333 = vmatpush1.msra.mxu0 %v2322
        %2334 = vmatprep.subr.mxu0 0.0
        %2335 = vmatpush1.msra.mxu0 %v2323
        %2336 = vmatprep.subr.mxu0 0.0
        %2337 = vmatpush1.msra.mxu0 %v2324
        %2338 = vmatprep.subr.mxu0 0.0
        %2339 = vmatpush1.msra.mxu0 %v2325
        %2340 = vmatprep.subr.mxu0 0.0
        %2341 = vmatpush1.msra.mxu0 0.0
        %2342 = vmatprep.subr.mxu0 0.0
        %2343 = vmatpush1.msra.mxu0 0.0
        %2344 = vmatprep.subr.mxu0 0.0
        %2345 = vmatpush1.msra.mxu0 0.0
        %2346 = vmatprep.subr.mxu0 0.0
        %2347 = vmatpush1.msra.mxu0 0.0
        %2348 = vmatprep.subr.mxu0 0.0
        %2349 = vmatpush1.msra.mxu0 0.0
        %2350 = vmatprep.subr.mxu0 0.0
        %2351 = vmatpush1.msra.mxu0 0.0
        %2352 = vmatprep.subr.mxu0 0.0
        %2353 = vmatpush1.msra.mxu0 0.0
        %2354 = vmatprep.subr.mxu0 0.0
        %2355 = vmatpush1.msra.mxu0 0.0
        %2356 = vmatprep.subr.mxu0 0.0
        %2357 = vmatpush1.msra.mxu0 0.0
        %2358 = vmatprep.subr.mxu0 0.0
        %2359 = vmatpush1.msra.mxu0 0.0
        %2360 = vmatprep.subr.mxu0 0.0
        %2361 = vmatpush1.msra.mxu0 0.0
        %2362 = vmatprep.subr.mxu0 0.0
        %2363 = vmatpush1.msra.mxu0 0.0
        %2364 = vmatprep.subr.mxu0 0.0
        %2365 = vmatpush1.msra.mxu0 0.0
        %2366 = vmatprep.subr.mxu0 0.0
        %2367 = vmatpush1.msra.mxu0 0.0
        %2368 = vmatprep.subr.mxu0 0.0
        %2369 = vmatpush1.msra.mxu0 0.0
        %2370 = vmatprep.subr.mxu0 0.0
        %2371 = vmatpush1.msra.mxu0 0.0
        %2372 = vmatprep.subr.mxu0 0.0
        %2373 = vmatpush1.msra.mxu0 0.0
        %2374 = vmatprep.subr.mxu0 0.0
        %2375 = vmatpush1.msra.mxu0 0.0
        %2376 = vmatprep.subr.mxu0 0.0
        %2377 = vmatpush1.msra.mxu0 0.0
        %2378 = vmatprep.subr.mxu0 0.0
        %2379 = vmatpush1.msra.mxu0 0.0
        %2380 = vmatprep.subr.mxu0 0.0
        %2381 = vmatpush1.msra.mxu0 0.0
        %2382 = vmatprep.subr.mxu0 0.0
        %2383 = vmatpush1.msra.mxu0 0.0
        %2384 = vmatprep.subr.mxu0 0.0
        %2385 = vmatpush1.msra.mxu0 0.0
        %2386 = vmatprep.subr.mxu0 0.0
        %2387 = vmatpush1.msra.mxu0 0.0
        %2388 = vmatprep.subr.mxu0 0.0
        %2389 = vmatpush1.msra.mxu0 0.0
        %2390 = vmatprep.subr.mxu0 0.0
        %2391 = vmatpush1.msra.mxu0 0.0
        %2392 = vmatprep.subr.mxu0 0.0
        %2393 = vmatpush1.msra.mxu0 0.0
        %2394 = vmatprep.subr.mxu0 0.0
        %2395 = vmatpush1.msra.mxu0 0.0
        %2396 = vmatprep.mubr.f32.mxu0 0.0
        %2397 = vmatmul.mubr.f32.gmra.mrb[0].mxu0 %v2327
        %v2398 = vpop.f32.mrb[0].mxu0
        %v2399 = vadd.f32 0.0, %v2398
        %v2400 = vpop.f32.mrb[0].mxu0
        %2401 = vmatprep.mubr.f32.mxu0 0.0
        %2402 = vmatmul.mubr.f32.gmra.mrb[0].mxu0 %v2330
        %v2403 = vpop.f32.mrb[0].mxu0
        %v2404 = vadd.f32 0.0, %v2403
        %v2405 = vpop.f32.mrb[0].mxu0
        %2406 = vdwg.mxu0
        %2407 = vst [vmem:[%s17] sm:$0xff] %v2399
        %2408 = vst [vmem:[%s17 + $0x8] sm:$0xff] %v2404
      $region96: #{_lambda_.1} parent=87 // pred_fallthru
        _
      // Predicated region
      $region97: #{_lambda_.1} parent=87 // pred_check
        %p2409 = pneg %p458
      $region98: #{_lambda_.1} parent=87 // pred_check_branch
        %2411 = sbr.rel (%p2409) target = $region100
      $region99: #{_lambda_.1} parent=87 // pred_region
        _
      $region100: #{_lambda_.1} parent=87 // pred_fallthru
        _
      // Predicated region
      $region101: #{_lambda_.1} parent=87 // pred_check
        %p2412 = pneg %p458
      $region102: #{_lambda_.1} parent=87 // pred_check_branch
        %2414 = sbr.rel (%p2412) target = $region104
      $region103: #{_lambda_.1} parent=87 // pred_region
        _
      $region104: #{_lambda_.1} parent=87 // pred_fallthru
        _
    $region88: #{_lambda_.1} parent=5 // pred_fallthru
      _
    %p2415 = scmp.le.s32.totalorder 2, %s23
    // Predicated region
    $region105: #{_lambda_.1} parent=5 // pred_check
      %p2416 = pneg %p2415
    $region106: #{_lambda_.1} parent=5 // pred_check_branch
      %2418 = sbr.rel (%p2416) target = $region108
    $region107: #{_lambda_.1} parent=5 // pred_region
      %s2419 = ssub.s32 %s23, 2
    $region108: #{_lambda_.1} parent=5 // pred_fallthru
      _
  $region6: #{_lambda_.1} parent=0 // loop_footer
    %s27 = sadd.s32 1, %s23
  $region7: #{_lambda_.1} parent=0 // loop_footer_branch
    %22 = sbr.rel target = $region3
  $region8: #{_lambda_.1} parent=0 // loop_exit
    _

</llo_original>
